<compile_context>
chip_gen: v7x
topology: tpu7x:2x2x1
jax: 0.10.0
libtpu: 0.0.40
codegen_flags: <defaults>
</compile_context>

<pallas_src>
import functools

import jax
import jax.numpy as jnp
from jax.experimental import pallas as pl
from jax.experimental.pallas import tpu as pltpu


def _gate_acts(gates, H):
    """Fused LSTM gate activations on a full [1,4H] f32 vreg (PyTorch i,f,g,o order)."""
    sig = jax.nn.sigmoid(gates)          # one EUP chain over the full 4H lanes
    tg = jnp.tanh(gates)                 # one EUP chain over the full 4H lanes
    i = sig[:, 0 * H:1 * H]
    f = sig[:, 1 * H:2 * H]
    g = tg[:, 2 * H:3 * H]
    o = sig[:, 3 * H:4 * H]
    return i, f, g, o


def seq2seq_attn_kernel(
    enc_in_ref, dec_in_ref,                      # [T,H] bf16 (dec_in already relu'd)
    wih_e_ref, whh_e_ref, b_e_ref,               # [H,4H] bf16, [H,4H] bf16, [1,4H] f32
    wih_d_ref, b_d_ref,                          # [H,4H] bf16, [1,4H] f32
    w_fused_ref, comb_c_fused_ref, comb_b_fused_ref,   # [H,4H] bf16, [H,4H] f32, [1,4H] f32
    out_w_ref, out_b_ref,                        # [H,Vp] f32, [1,Vp] f32
    preds_ref,                                   # [T,Vp] f32
    dec_h_scratch,                               # VMEM [T,H] f32
    *, T, H,
):
    f32 = jnp.float32
    bf16 = jnp.bfloat16

    # Recurrent weights hoisted once above the unrolled loops (4 vregs each).
    whh_e = whh_e_ref[...]
    w_fused = w_fused_ref[...]

    # -------- encoder: nn.LSTM(H, H) over the T input embeddings --------------
    # Batched, non-recurrent half of the gates: one [T,4H] matmul up front.
    x_proj_e = (jnp.dot(enc_in_ref[...], wih_e_ref[...],
                        preferred_element_type=f32) + b_e_ref[...])          # [T,4H] f32

    h = jnp.zeros((1, H), f32)
    c = jnp.zeros((1, H), f32)
    ctx_sum = jnp.zeros((1, H), f32)     # running sum of encoder outputs
    for t in range(T):                   # T small & static -> unrolled
        gates = x_proj_e[t:t + 1, :] + jnp.dot(h.astype(bf16), whh_e,
                                               preferred_element_type=f32)
        i, f, g, o = _gate_acts(gates, H)
        c = f * c + i * g
        h = o * jnp.tanh(c)
        ctx_sum = ctx_sum + h

    # -------- attention (degenerate softmax) folded into the decoder W_hh ------
    # nn.Softmax() over a [T,1] score softmaxes a size-1 axis => weights == 1.0,
    # so context == sum_t(encoder_outputs): loop-invariant.  The U/W/V/tanh path
    # has zero effect on the output and is omitted.  The whole combine matmul is
    # folded into W_hh^T, so it disappears from the per-step dependent chain.
    bias_fused = (jnp.dot(ctx_sum, comb_c_fused_ref[...],
                          preferred_element_type=f32) + comb_b_fused_ref[...])   # [1,4H]

    # -------- decoder loop (teacher forcing branch) ----------------------------
    # Batched non-recurrent half of the decoder gates, with the loop-invariant
    # fused context/bias term added once for all T steps.
    x_proj_d = (jnp.dot(dec_in_ref[...], wih_d_ref[...],
                        preferred_element_type=f32)
                + b_d_ref[...] + bias_fused)                                  # [T,4H] f32

    dh, dc = h, c                        # (h_n, c_n) from the encoder
    for t in range(T):
        # gates = x_t @ W_ih^T + b + attn_h @ W_hh^T, with the combine folded in.
        gates = x_proj_d[t:t + 1, :] + jnp.dot(dh.astype(bf16), w_fused,
                                               preferred_element_type=f32)
        i, f, g, o = _gate_acts(gates, H)
        dc = f * dc + i * g
        dh = o * jnp.tanh(dc)
        dec_h_scratch[t:t + 1, :] = dh

    # -------- deferred output projection: one batched matmul + one store -------
    preds_ref[...] = (jnp.dot(dec_h_scratch[...], out_w_ref[...],
                              preferred_element_type=f32) + out_b_ref[...])   # [T,Vp]


def prepare_params(params):
    """One-time weight preprocessing (transposes, bias sums, fusion, padding, casts)."""
    f32, bf16 = jnp.float32, jnp.bfloat16
    H = params["embed"].shape[1]
    V = params["out_w"].shape[0]
    Vp = ((V + 127) // 128) * 128        # lane-dense (multiple-of-128) output width

    whh_d_T = jnp.asarray(params["dec_w_hh"], f32).T             # [H, 4H]
    comb_w = jnp.asarray(params["attn_comb_w"], f32)              # [H, 2H]
    comb_s_T = comb_w[:, :H].T                                    # hidden half
    comb_c_T = comb_w[:, H:].T                                    # context half
    comb_b = jnp.asarray(params["attn_comb_b"], f32)[None, :]

    out_w_p = jnp.zeros((H, Vp), f32).at[:, :V].set(
        jnp.asarray(params["out_w"], f32).T)
    out_b_p = jnp.zeros((1, Vp), f32).at[0, :V].set(
        jnp.asarray(params["out_b"], f32))

    return {
        "embed": jnp.asarray(params["embed"], f32),
        "wih_e": jnp.asarray(params["enc_w_ih"], f32).T.astype(bf16),
        "whh_e": jnp.asarray(params["enc_w_hh"], f32).T.astype(bf16),
        "b_e": (jnp.asarray(params["enc_b_ih"], f32)
                + jnp.asarray(params["enc_b_hh"], f32))[None, :],
        "wih_d": jnp.asarray(params["dec_w_ih"], f32).T.astype(bf16),
        "b_d": (jnp.asarray(params["dec_b_ih"], f32)
                + jnp.asarray(params["dec_b_hh"], f32))[None, :],
        # combine folded into decoder W_hh:
        "w_fused": (comb_s_T @ whh_d_T).astype(bf16),             # [H, 4H]
        "comb_c_fused": comb_c_T @ whh_d_T,                       # [H, 4H] f32
        "comb_b_fused": comb_b @ whh_d_T,                         # [1, 4H] f32
        "out_w_p": out_w_p,
        "out_b_p": out_b_p,
    }


@functools.partial(jax.jit, static_argnames=("vocab_size",))
def model_forward(prepped, input_seq, gold_seq, *, vocab_size):
    """Teacher-forced forward pass. Returns (predictions [T, V], predicted_seq [T])."""
    f32, bf16 = jnp.float32, jnp.bfloat16
    T = int(input_seq.shape[0])
    H = prepped["embed"].shape[1]
    Vp = prepped["out_w_p"].shape[1]
    V = vocab_size

    enc_in = prepped["embed"][input_seq].astype(bf16)                        # [T, H]
    # decoder input at step 0 is zeros(1,1,H); afterwards embeds(gold_seq[i-1]);
    # the loop applies relu before the LSTM -> apply it here (fused in the jit).
    dec_prev = jnp.concatenate(
        [jnp.zeros((1, H), f32), prepped["embed"][gold_seq[:-1]]], axis=0)
    dec_in = jnp.maximum(dec_prev, 0.0).astype(bf16)                         # [T, H]

    operands = [
        enc_in, dec_in,
        prepped["wih_e"], prepped["whh_e"], prepped["b_e"],
        prepped["wih_d"], prepped["b_d"],
        prepped["w_fused"], prepped["comb_c_fused"], prepped["comb_b_fused"],
        prepped["out_w_p"], prepped["out_b_p"],
    ]
    in_specs = [pl.BlockSpec(o.shape, lambda i: (0, 0)) for o in operands]

    flops = 2 * (4 * T * H * 4 * H + T * H * Vp + H * 4 * H)
    transcendentals = 2 * T * (2 * 4 * H + H)
    bytes_accessed = (sum(o.size * o.dtype.itemsize for o in operands)
                      + T * Vp * 4)

    kernel = functools.partial(seq2seq_attn_kernel, T=T, H=H)
    preds_padded = pl.pallas_call(
        kernel,
        out_shape=jax.ShapeDtypeStruct((T, Vp), f32),
        grid=(1,),
        in_specs=in_specs,
        out_specs=pl.BlockSpec((T, Vp), lambda i: (0, 0)),
        scratch_shapes=[pltpu.VMEM((T, H), f32)],
        compiler_params=pltpu.CompilerParams(dimension_semantics=("arbitrary",)),
        cost_estimate=pl.CostEstimate(flops=flops,
                                      transcendentals=transcendentals,
                                      bytes_accessed=bytes_accessed),
    )(*operands)

    # Padded logit columns (V..Vp) are exactly 0; slice them off before argmax.
    preds = preds_padded[:, :V]
    predicted_seq = jnp.argmax(preds, axis=1)   # torch.max(pred_i, 0)[1] per step
    return preds, predicted_seq


def init_params(key, vocab_size, hidden_dim, attn_size=128):
    """Deterministic synthetic init (PyTorch-like shapes/scales).

    attn U/W/V params are kept for fidelity with the module's parameter set, but
    they feed a softmax over a size-1 axis and therefore never affect the output;
    the kernel omits them.
    """
    H, A, V = hidden_dim, attn_size, vocab_size
    ks = iter(jax.random.split(key, 20))

    def u(shape, bound):
        return jax.random.uniform(next(ks), shape, jnp.float32, -bound, bound)

    kH = 1.0 / (H ** 0.5)
    kA = 1.0 / (A ** 0.5)
    k2H = 1.0 / ((2 * H) ** 0.5)
    return {
        "embed": jax.random.normal(next(ks), (V, H), jnp.float32),
        "enc_w_ih": u((4 * H, H), kH), "enc_w_hh": u((4 * H, H), kH),
        "enc_b_ih": u((4 * H,), kH),   "enc_b_hh": u((4 * H,), kH),
        "dec_w_ih": u((4 * H, H), kH), "dec_w_hh": u((4 * H, H), kH),
        "dec_b_ih": u((4 * H,), kH),   "dec_b_hh": u((4 * H,), kH),
        "attn_u_w": u((A, H), kH),     "attn_u_b": u((A,), kH),
        "attn_w_w": u((A, H), kH),     "attn_w_b": u((A,), kH),
        "attn_v_w": u((1, A), kA),     "attn_v_b": u((1,), kA),
        "attn_comb_w": u((H, 2 * H), k2H), "attn_comb_b": u((H,), k2H),
        "out_w": u((V, H), kH),        "out_b": u((V,), kH),
    }


if __name__ == "__main__":
    key = jax.random.PRNGKey(0)
    pkey, ikey, gkey = jax.random.split(key, 3)

    T = 8        # sequence length
    H = 32       # hidden_dim (small variant of the module's default 64)
    A = 128      # attn_size
    V = 64       # vocab_size

    params = init_params(pkey, vocab_size=V, hidden_dim=H, attn_size=A)
    prepped = prepare_params(params)          # one-time weight preprocessing
    input_seq = jax.random.randint(ikey, (T,), 0, V)
    gold_seq = jax.random.randint(gkey, (T,), 0, V)

    preds, predicted_seq = model_forward(prepped, input_seq, gold_seq, vocab_size=V)
    jax.block_until_ready((preds, predicted_seq))

    assert preds.shape == (T, V)
    assert predicted_seq.shape == (T,)
    print("KERNEL_OK")
</pallas_src>

<mosaic_0001>
module attributes {stable_mosaic.version = 11 : i64} {
  func.func @seq2seq_attn_kernel(%arg0: i32, %arg1: memref<8x32xbf16, #tpu.memory_space<vmem>>, %arg2: memref<8x32xbf16, #tpu.memory_space<vmem>>, %arg3: memref<32x128xbf16, #tpu.memory_space<vmem>>, %arg4: memref<32x128xbf16, #tpu.memory_space<vmem>>, %arg5: memref<1x128xf32, #tpu.memory_space<vmem>>, %arg6: memref<32x128xbf16, #tpu.memory_space<vmem>>, %arg7: memref<1x128xf32, #tpu.memory_space<vmem>>, %arg8: memref<32x128xbf16, #tpu.memory_space<vmem>>, %arg9: memref<32x128xf32, #tpu.memory_space<vmem>>, %arg10: memref<1x128xf32, #tpu.memory_space<vmem>>, %arg11: memref<32x128xf32, #tpu.memory_space<vmem>>, %arg12: memref<1x128xf32, #tpu.memory_space<vmem>>, %arg13: memref<8x128xf32, #tpu.memory_space<vmem>>, %arg14: memref<8x32xf32, #tpu.memory_space<vmem>>) attributes {dimension_semantics = [#tpu.dimension_semantics<arbitrary>], iteration_bounds = array<i64: 1>, scalar_prefetch = 0 : i64, scratch_operands = 1 : i64, tpu.core_type = #tpu.core_type<tc>, window_params = [{pipeline_mode = #tpu.pipeline_mode<synchronous>, transform_indices = @transform_0, window_bounds = array<i64: 8, 32>}, {pipeline_mode = #tpu.pipeline_mode<synchronous>, transform_indices = @transform_1, window_bounds = array<i64: 8, 32>}, {pipeline_mode = #tpu.pipeline_mode<synchronous>, transform_indices = @transform_2, window_bounds = array<i64: 32, 128>}, {pipeline_mode = #tpu.pipeline_mode<synchronous>, transform_indices = @transform_3, window_bounds = array<i64: 32, 128>}, {pipeline_mode = #tpu.pipeline_mode<synchronous>, transform_indices = @transform_4, window_bounds = array<i64: 1, 128>}, {pipeline_mode = #tpu.pipeline_mode<synchronous>, transform_indices = @transform_5, window_bounds = array<i64: 32, 128>}, {pipeline_mode = #tpu.pipeline_mode<synchronous>, transform_indices = @transform_6, window_bounds = array<i64: 1, 128>}, {pipeline_mode = #tpu.pipeline_mode<synchronous>, transform_indices = @transform_7, window_bounds = array<i64: 32, 128>}, {pipeline_mode = #tpu.pipeline_mode<synchronous>, transform_indices = @transform_8, window_bounds = array<i64: 32, 128>}, {pipeline_mode = #tpu.pipeline_mode<synchronous>, transform_indices = @transform_9, window_bounds = array<i64: 1, 128>}, {pipeline_mode = #tpu.pipeline_mode<synchronous>, transform_indices = @transform_10, window_bounds = array<i64: 32, 128>}, {pipeline_mode = #tpu.pipeline_mode<synchronous>, transform_indices = @transform_11, window_bounds = array<i64: 1, 128>}, {pipeline_mode = #tpu.pipeline_mode<synchronous>, transform_indices = @transform_12, window_bounds = array<i64: 8, 128>}]} {
    %c0 = arith.constant 0 : index
    %c0_0 = arith.constant 0 : index
    %0 = vector.load %arg4[%c0, %c0_0] : memref<32x128xbf16, #tpu.memory_space<vmem>>, vector<32x128xbf16>
    %c0_1 = arith.constant 0 : index
    %c0_2 = arith.constant 0 : index
    %1 = vector.load %arg8[%c0_1, %c0_2] : memref<32x128xbf16, #tpu.memory_space<vmem>>, vector<32x128xbf16>
    %c0_3 = arith.constant 0 : index
    %c0_4 = arith.constant 0 : index
    %2 = vector.load %arg1[%c0_3, %c0_4] : memref<8x32xbf16, #tpu.memory_space<vmem>>, vector<8x32xbf16>
    %c0_5 = arith.constant 0 : index
    %c0_6 = arith.constant 0 : index
    %3 = vector.load %arg3[%c0_5, %c0_6] : memref<32x128xbf16, #tpu.memory_space<vmem>>, vector<32x128xbf16>
    %cst = arith.constant dense<0.000000e+00> : vector<8x128xf32>
    %4 = tpu.matmul %2, %3, %cst {dimension_numbers = #tpu.dot_dimension_numbers<[1], [0], [0], [1], [0, 0, 1, 1], [], []>} : vector<8x32xbf16>, vector<32x128xbf16>, vector<8x128xf32> -> vector<8x128xf32>
    %c0_7 = arith.constant 0 : index
    %c0_8 = arith.constant 0 : index
    %5 = vector.load %arg5[%c0_7, %c0_8] : memref<1x128xf32, #tpu.memory_space<vmem>>, vector<1x128xf32>
    %6 = vector.broadcast %5 : vector<1x128xf32> to vector<8x128xf32>
    %7 = arith.addf %4, %6 : vector<8x128xf32>
    %cst_9 = arith.constant 0.000000e+00 : f32
    %8 = vector.broadcast %cst_9 : f32 to vector<1x32xf32>
    %cst_10 = arith.constant 0.000000e+00 : f32
    %9 = vector.broadcast %cst_10 : f32 to vector<1x32xf32>
    %cst_11 = arith.constant 0.000000e+00 : f32
    %10 = vector.broadcast %cst_11 : f32 to vector<1x32xf32>
    %11 = vector.extract_strided_slice %7 {offsets = [0, 0], sizes = [1, 128], strides = [1, 1]} : vector<8x128xf32> to vector<1x128xf32>
    %12 = arith.truncf %8 : vector<1x32xf32> to vector<1x32xbf16>
    %cst_12 = arith.constant dense<0.000000e+00> : vector<1x128xf32>
    %13 = tpu.matmul %12, %0, %cst_12 {dimension_numbers = #tpu.dot_dimension_numbers<[1], [0], [0], [1], [0, 0, 1, 1], [], []>} : vector<1x32xbf16>, vector<32x128xbf16>, vector<1x128xf32> -> vector<1x128xf32>
    %14 = arith.addf %11, %13 : vector<1x128xf32>
    %15 = arith.negf %14 : vector<1x128xf32>
    %16 = math.exp %15 : vector<1x128xf32>
    %cst_13 = arith.constant 1.000000e+00 : f32
    %17 = vector.broadcast %cst_13 : f32 to vector<1x128xf32>
    %18 = arith.addf %17, %16 : vector<1x128xf32>
    %19 = arith.divf %17, %18 : vector<1x128xf32>
    %20 = math.tanh %14 : vector<1x128xf32>
    %21 = vector.extract_strided_slice %19 {offsets = [0, 0], sizes = [1, 32], strides = [1, 1]} : vector<1x128xf32> to vector<1x32xf32>
    %22 = vector.extract_strided_slice %19 {offsets = [0, 32], sizes = [1, 32], strides = [1, 1]} : vector<1x128xf32> to vector<1x32xf32>
    %23 = vector.extract_strided_slice %20 {offsets = [0, 64], sizes = [1, 32], strides = [1, 1]} : vector<1x128xf32> to vector<1x32xf32>
    %24 = vector.extract_strided_slice %19 {offsets = [0, 96], sizes = [1, 32], strides = [1, 1]} : vector<1x128xf32> to vector<1x32xf32>
    %25 = arith.mulf %22, %9 : vector<1x32xf32>
    %26 = arith.mulf %21, %23 : vector<1x32xf32>
    %27 = arith.addf %25, %26 : vector<1x32xf32>
    %28 = math.tanh %27 : vector<1x32xf32>
    %29 = arith.mulf %24, %28 : vector<1x32xf32>
    %30 = arith.addf %10, %29 : vector<1x32xf32>
    %31 = vector.extract_strided_slice %7 {offsets = [1, 0], sizes = [1, 128], strides = [1, 1]} : vector<8x128xf32> to vector<1x128xf32>
    %32 = arith.truncf %29 : vector<1x32xf32> to vector<1x32xbf16>
    %cst_14 = arith.constant dense<0.000000e+00> : vector<1x128xf32>
    %33 = tpu.matmul %32, %0, %cst_14 {dimension_numbers = #tpu.dot_dimension_numbers<[1], [0], [0], [1], [0, 0, 1, 1], [], []>} : vector<1x32xbf16>, vector<32x128xbf16>, vector<1x128xf32> -> vector<1x128xf32>
    %34 = arith.addf %31, %33 : vector<1x128xf32>
    %35 = arith.negf %34 : vector<1x128xf32>
    %36 = math.exp %35 : vector<1x128xf32>
    %cst_15 = arith.constant 1.000000e+00 : f32
    %37 = vector.broadcast %cst_15 : f32 to vector<1x128xf32>
    %38 = arith.addf %37, %36 : vector<1x128xf32>
    %39 = arith.divf %37, %38 : vector<1x128xf32>
    %40 = math.tanh %34 : vector<1x128xf32>
    %41 = vector.extract_strided_slice %39 {offsets = [0, 0], sizes = [1, 32], strides = [1, 1]} : vector<1x128xf32> to vector<1x32xf32>
    %42 = vector.extract_strided_slice %39 {offsets = [0, 32], sizes = [1, 32], strides = [1, 1]} : vector<1x128xf32> to vector<1x32xf32>
    %43 = vector.extract_strided_slice %40 {offsets = [0, 64], sizes = [1, 32], strides = [1, 1]} : vector<1x128xf32> to vector<1x32xf32>
    %44 = vector.extract_strided_slice %39 {offsets = [0, 96], sizes = [1, 32], strides = [1, 1]} : vector<1x128xf32> to vector<1x32xf32>
    %45 = arith.mulf %42, %27 : vector<1x32xf32>
    %46 = arith.mulf %41, %43 : vector<1x32xf32>
    %47 = arith.addf %45, %46 : vector<1x32xf32>
    %48 = math.tanh %47 : vector<1x32xf32>
    %49 = arith.mulf %44, %48 : vector<1x32xf32>
    %50 = arith.addf %30, %49 : vector<1x32xf32>
    %51 = vector.extract_strided_slice %7 {offsets = [2, 0], sizes = [1, 128], strides = [1, 1]} : vector<8x128xf32> to vector<1x128xf32>
    %52 = arith.truncf %49 : vector<1x32xf32> to vector<1x32xbf16>
    %cst_16 = arith.constant dense<0.000000e+00> : vector<1x128xf32>
    %53 = tpu.matmul %52, %0, %cst_16 {dimension_numbers = #tpu.dot_dimension_numbers<[1], [0], [0], [1], [0, 0, 1, 1], [], []>} : vector<1x32xbf16>, vector<32x128xbf16>, vector<1x128xf32> -> vector<1x128xf32>
    %54 = arith.addf %51, %53 : vector<1x128xf32>
    %55 = arith.negf %54 : vector<1x128xf32>
    %56 = math.exp %55 : vector<1x128xf32>
    %cst_17 = arith.constant 1.000000e+00 : f32
    %57 = vector.broadcast %cst_17 : f32 to vector<1x128xf32>
    %58 = arith.addf %57, %56 : vector<1x128xf32>
    %59 = arith.divf %57, %58 : vector<1x128xf32>
    %60 = math.tanh %54 : vector<1x128xf32>
    %61 = vector.extract_strided_slice %59 {offsets = [0, 0], sizes = [1, 32], strides = [1, 1]} : vector<1x128xf32> to vector<1x32xf32>
    %62 = vector.extract_strided_slice %59 {offsets = [0, 32], sizes = [1, 32], strides = [1, 1]} : vector<1x128xf32> to vector<1x32xf32>
    %63 = vector.extract_strided_slice %60 {offsets = [0, 64], sizes = [1, 32], strides = [1, 1]} : vector<1x128xf32> to vector<1x32xf32>
    %64 = vector.extract_strided_slice %59 {offsets = [0, 96], sizes = [1, 32], strides = [1, 1]} : vector<1x128xf32> to vector<1x32xf32>
    %65 = arith.mulf %62, %47 : vector<1x32xf32>
    %66 = arith.mulf %61, %63 : vector<1x32xf32>
    %67 = arith.addf %65, %66 : vector<1x32xf32>
    %68 = math.tanh %67 : vector<1x32xf32>
    %69 = arith.mulf %64, %68 : vector<1x32xf32>
    %70 = arith.addf %50, %69 : vector<1x32xf32>
    %71 = vector.extract_strided_slice %7 {offsets = [3, 0], sizes = [1, 128], strides = [1, 1]} : vector<8x128xf32> to vector<1x128xf32>
    %72 = arith.truncf %69 : vector<1x32xf32> to vector<1x32xbf16>
    %cst_18 = arith.constant dense<0.000000e+00> : vector<1x128xf32>
    %73 = tpu.matmul %72, %0, %cst_18 {dimension_numbers = #tpu.dot_dimension_numbers<[1], [0], [0], [1], [0, 0, 1, 1], [], []>} : vector<1x32xbf16>, vector<32x128xbf16>, vector<1x128xf32> -> vector<1x128xf32>
    %74 = arith.addf %71, %73 : vector<1x128xf32>
    %75 = arith.negf %74 : vector<1x128xf32>
    %76 = math.exp %75 : vector<1x128xf32>
    %cst_19 = arith.constant 1.000000e+00 : f32
    %77 = vector.broadcast %cst_19 : f32 to vector<1x128xf32>
    %78 = arith.addf %77, %76 : vector<1x128xf32>
    %79 = arith.divf %77, %78 : vector<1x128xf32>
    %80 = math.tanh %74 : vector<1x128xf32>
    %81 = vector.extract_strided_slice %79 {offsets = [0, 0], sizes = [1, 32], strides = [1, 1]} : vector<1x128xf32> to vector<1x32xf32>
    %82 = vector.extract_strided_slice %79 {offsets = [0, 32], sizes = [1, 32], strides = [1, 1]} : vector<1x128xf32> to vector<1x32xf32>
    %83 = vector.extract_strided_slice %80 {offsets = [0, 64], sizes = [1, 32], strides = [1, 1]} : vector<1x128xf32> to vector<1x32xf32>
    %84 = vector.extract_strided_slice %79 {offsets = [0, 96], sizes = [1, 32], strides = [1, 1]} : vector<1x128xf32> to vector<1x32xf32>
    %85 = arith.mulf %82, %67 : vector<1x32xf32>
    %86 = arith.mulf %81, %83 : vector<1x32xf32>
    %87 = arith.addf %85, %86 : vector<1x32xf32>
    %88 = math.tanh %87 : vector<1x32xf32>
    %89 = arith.mulf %84, %88 : vector<1x32xf32>
    %90 = arith.addf %70, %89 : vector<1x32xf32>
    %91 = vector.extract_strided_slice %7 {offsets = [4, 0], sizes = [1, 128], strides = [1, 1]} : vector<8x128xf32> to vector<1x128xf32>
    %92 = arith.truncf %89 : vector<1x32xf32> to vector<1x32xbf16>
    %cst_20 = arith.constant dense<0.000000e+00> : vector<1x128xf32>
    %93 = tpu.matmul %92, %0, %cst_20 {dimension_numbers = #tpu.dot_dimension_numbers<[1], [0], [0], [1], [0, 0, 1, 1], [], []>} : vector<1x32xbf16>, vector<32x128xbf16>, vector<1x128xf32> -> vector<1x128xf32>
    %94 = arith.addf %91, %93 : vector<1x128xf32>
    %95 = arith.negf %94 : vector<1x128xf32>
    %96 = math.exp %95 : vector<1x128xf32>
    %cst_21 = arith.constant 1.000000e+00 : f32
    %97 = vector.broadcast %cst_21 : f32 to vector<1x128xf32>
    %98 = arith.addf %97, %96 : vector<1x128xf32>
    %99 = arith.divf %97, %98 : vector<1x128xf32>
    %100 = math.tanh %94 : vector<1x128xf32>
    %101 = vector.extract_strided_slice %99 {offsets = [0, 0], sizes = [1, 32], strides = [1, 1]} : vector<1x128xf32> to vector<1x32xf32>
    %102 = vector.extract_strided_slice %99 {offsets = [0, 32], sizes = [1, 32], strides = [1, 1]} : vector<1x128xf32> to vector<1x32xf32>
    %103 = vector.extract_strided_slice %100 {offsets = [0, 64], sizes = [1, 32], strides = [1, 1]} : vector<1x128xf32> to vector<1x32xf32>
    %104 = vector.extract_strided_slice %99 {offsets = [0, 96], sizes = [1, 32], strides = [1, 1]} : vector<1x128xf32> to vector<1x32xf32>
    %105 = arith.mulf %102, %87 : vector<1x32xf32>
    %106 = arith.mulf %101, %103 : vector<1x32xf32>
    %107 = arith.addf %105, %106 : vector<1x32xf32>
    %108 = math.tanh %107 : vector<1x32xf32>
    %109 = arith.mulf %104, %108 : vector<1x32xf32>
    %110 = arith.addf %90, %109 : vector<1x32xf32>
    %111 = vector.extract_strided_slice %7 {offsets = [5, 0], sizes = [1, 128], strides = [1, 1]} : vector<8x128xf32> to vector<1x128xf32>
    %112 = arith.truncf %109 : vector<1x32xf32> to vector<1x32xbf16>
    %cst_22 = arith.constant dense<0.000000e+00> : vector<1x128xf32>
    %113 = tpu.matmul %112, %0, %cst_22 {dimension_numbers = #tpu.dot_dimension_numbers<[1], [0], [0], [1], [0, 0, 1, 1], [], []>} : vector<1x32xbf16>, vector<32x128xbf16>, vector<1x128xf32> -> vector<1x128xf32>
    %114 = arith.addf %111, %113 : vector<1x128xf32>
    %115 = arith.negf %114 : vector<1x128xf32>
    %116 = math.exp %115 : vector<1x128xf32>
    %cst_23 = arith.constant 1.000000e+00 : f32
    %117 = vector.broadcast %cst_23 : f32 to vector<1x128xf32>
    %118 = arith.addf %117, %116 : vector<1x128xf32>
    %119 = arith.divf %117, %118 : vector<1x128xf32>
    %120 = math.tanh %114 : vector<1x128xf32>
    %121 = vector.extract_strided_slice %119 {offsets = [0, 0], sizes = [1, 32], strides = [1, 1]} : vector<1x128xf32> to vector<1x32xf32>
    %122 = vector.extract_strided_slice %119 {offsets = [0, 32], sizes = [1, 32], strides = [1, 1]} : vector<1x128xf32> to vector<1x32xf32>
    %123 = vector.extract_strided_slice %120 {offsets = [0, 64], sizes = [1, 32], strides = [1, 1]} : vector<1x128xf32> to vector<1x32xf32>
    %124 = vector.extract_strided_slice %119 {offsets = [0, 96], sizes = [1, 32], strides = [1, 1]} : vector<1x128xf32> to vector<1x32xf32>
    %125 = arith.mulf %122, %107 : vector<1x32xf32>
    %126 = arith.mulf %121, %123 : vector<1x32xf32>
    %127 = arith.addf %125, %126 : vector<1x32xf32>
    %128 = math.tanh %127 : vector<1x32xf32>
    %129 = arith.mulf %124, %128 : vector<1x32xf32>
    %130 = arith.addf %110, %129 : vector<1x32xf32>
    %131 = vector.extract_strided_slice %7 {offsets = [6, 0], sizes = [1, 128], strides = [1, 1]} : vector<8x128xf32> to vector<1x128xf32>
    %132 = arith.truncf %129 : vector<1x32xf32> to vector<1x32xbf16>
    %cst_24 = arith.constant dense<0.000000e+00> : vector<1x128xf32>
    %133 = tpu.matmul %132, %0, %cst_24 {dimension_numbers = #tpu.dot_dimension_numbers<[1], [0], [0], [1], [0, 0, 1, 1], [], []>} : vector<1x32xbf16>, vector<32x128xbf16>, vector<1x128xf32> -> vector<1x128xf32>
    %134 = arith.addf %131, %133 : vector<1x128xf32>
    %135 = arith.negf %134 : vector<1x128xf32>
    %136 = math.exp %135 : vector<1x128xf32>
    %cst_25 = arith.constant 1.000000e+00 : f32
    %137 = vector.broadcast %cst_25 : f32 to vector<1x128xf32>
    %138 = arith.addf %137, %136 : vector<1x128xf32>
    %139 = arith.divf %137, %138 : vector<1x128xf32>
    %140 = math.tanh %134 : vector<1x128xf32>
    %141 = vector.extract_strided_slice %139 {offsets = [0, 0], sizes = [1, 32], strides = [1, 1]} : vector<1x128xf32> to vector<1x32xf32>
    %142 = vector.extract_strided_slice %139 {offsets = [0, 32], sizes = [1, 32], strides = [1, 1]} : vector<1x128xf32> to vector<1x32xf32>
    %143 = vector.extract_strided_slice %140 {offsets = [0, 64], sizes = [1, 32], strides = [1, 1]} : vector<1x128xf32> to vector<1x32xf32>
    %144 = vector.extract_strided_slice %139 {offsets = [0, 96], sizes = [1, 32], strides = [1, 1]} : vector<1x128xf32> to vector<1x32xf32>
    %145 = arith.mulf %142, %127 : vector<1x32xf32>
    %146 = arith.mulf %141, %143 : vector<1x32xf32>
    %147 = arith.addf %145, %146 : vector<1x32xf32>
    %148 = math.tanh %147 : vector<1x32xf32>
    %149 = arith.mulf %144, %148 : vector<1x32xf32>
    %150 = arith.addf %130, %149 : vector<1x32xf32>
    %151 = vector.extract_strided_slice %7 {offsets = [7, 0], sizes = [1, 128], strides = [1, 1]} : vector<8x128xf32> to vector<1x128xf32>
    %152 = arith.truncf %149 : vector<1x32xf32> to vector<1x32xbf16>
    %cst_26 = arith.constant dense<0.000000e+00> : vector<1x128xf32>
    %153 = tpu.matmul %152, %0, %cst_26 {dimension_numbers = #tpu.dot_dimension_numbers<[1], [0], [0], [1], [0, 0, 1, 1], [], []>} : vector<1x32xbf16>, vector<32x128xbf16>, vector<1x128xf32> -> vector<1x128xf32>
    %154 = arith.addf %151, %153 : vector<1x128xf32>
    %155 = arith.negf %154 : vector<1x128xf32>
    %156 = math.exp %155 : vector<1x128xf32>
    %cst_27 = arith.constant 1.000000e+00 : f32
    %157 = vector.broadcast %cst_27 : f32 to vector<1x128xf32>
    %158 = arith.addf %157, %156 : vector<1x128xf32>
    %159 = arith.divf %157, %158 : vector<1x128xf32>
    %160 = math.tanh %154 : vector<1x128xf32>
    %161 = vector.extract_strided_slice %159 {offsets = [0, 0], sizes = [1, 32], strides = [1, 1]} : vector<1x128xf32> to vector<1x32xf32>
    %162 = vector.extract_strided_slice %159 {offsets = [0, 32], sizes = [1, 32], strides = [1, 1]} : vector<1x128xf32> to vector<1x32xf32>
    %163 = vector.extract_strided_slice %160 {offsets = [0, 64], sizes = [1, 32], strides = [1, 1]} : vector<1x128xf32> to vector<1x32xf32>
    %164 = vector.extract_strided_slice %159 {offsets = [0, 96], sizes = [1, 32], strides = [1, 1]} : vector<1x128xf32> to vector<1x32xf32>
    %165 = arith.mulf %162, %147 : vector<1x32xf32>
    %166 = arith.mulf %161, %163 : vector<1x32xf32>
    %167 = arith.addf %165, %166 : vector<1x32xf32>
    %168 = math.tanh %167 : vector<1x32xf32>
    %169 = arith.mulf %164, %168 : vector<1x32xf32>
    %170 = arith.addf %150, %169 : vector<1x32xf32>
    %c0_28 = arith.constant 0 : index
    %c0_29 = arith.constant 0 : index
    %171 = vector.load %arg9[%c0_28, %c0_29] : memref<32x128xf32, #tpu.memory_space<vmem>>, vector<32x128xf32>
    %cst_30 = arith.constant dense<0.000000e+00> : vector<1x128xf32>
    %172 = tpu.matmul %170, %171, %cst_30 {dimension_numbers = #tpu.dot_dimension_numbers<[1], [0], [0], [1], [0, 0, 1, 1], [], []>} : vector<1x32xf32>, vector<32x128xf32>, vector<1x128xf32> -> vector<1x128xf32>
    %c0_31 = arith.constant 0 : index
    %c0_32 = arith.constant 0 : index
    %173 = vector.load %arg10[%c0_31, %c0_32] : memref<1x128xf32, #tpu.memory_space<vmem>>, vector<1x128xf32>
    %174 = arith.addf %172, %173 : vector<1x128xf32>
    %c0_33 = arith.constant 0 : index
    %c0_34 = arith.constant 0 : index
    %175 = vector.load %arg2[%c0_33, %c0_34] : memref<8x32xbf16, #tpu.memory_space<vmem>>, vector<8x32xbf16>
    %c0_35 = arith.constant 0 : index
    %c0_36 = arith.constant 0 : index
    %176 = vector.load %arg6[%c0_35, %c0_36] : memref<32x128xbf16, #tpu.memory_space<vmem>>, vector<32x128xbf16>
    %cst_37 = arith.constant dense<0.000000e+00> : vector<8x128xf32>
    %177 = tpu.matmul %175, %176, %cst_37 {dimension_numbers = #tpu.dot_dimension_numbers<[1], [0], [0], [1], [0, 0, 1, 1], [], []>} : vector<8x32xbf16>, vector<32x128xbf16>, vector<8x128xf32> -> vector<8x128xf32>
    %c0_38 = arith.constant 0 : index
    %c0_39 = arith.constant 0 : index
    %178 = vector.load %arg7[%c0_38, %c0_39] : memref<1x128xf32, #tpu.memory_space<vmem>>, vector<1x128xf32>
    %179 = vector.broadcast %178 : vector<1x128xf32> to vector<8x128xf32>
    %180 = arith.addf %177, %179 : vector<8x128xf32>
    %181 = vector.broadcast %174 : vector<1x128xf32> to vector<8x128xf32>
    %182 = arith.addf %180, %181 : vector<8x128xf32>
    %183 = vector.extract_strided_slice %182 {offsets = [0, 0], sizes = [1, 128], strides = [1, 1]} : vector<8x128xf32> to vector<1x128xf32>
    %184 = arith.truncf %169 : vector<1x32xf32> to vector<1x32xbf16>
    %cst_40 = arith.constant dense<0.000000e+00> : vector<1x128xf32>
    %185 = tpu.matmul %184, %1, %cst_40 {dimension_numbers = #tpu.dot_dimension_numbers<[1], [0], [0], [1], [0, 0, 1, 1], [], []>} : vector<1x32xbf16>, vector<32x128xbf16>, vector<1x128xf32> -> vector<1x128xf32>
    %186 = arith.addf %183, %185 : vector<1x128xf32>
    %187 = arith.negf %186 : vector<1x128xf32>
    %188 = math.exp %187 : vector<1x128xf32>
    %cst_41 = arith.constant 1.000000e+00 : f32
    %189 = vector.broadcast %cst_41 : f32 to vector<1x128xf32>
    %190 = arith.addf %189, %188 : vector<1x128xf32>
    %191 = arith.divf %189, %190 : vector<1x128xf32>
    %192 = math.tanh %186 : vector<1x128xf32>
    %193 = vector.extract_strided_slice %191 {offsets = [0, 0], sizes = [1, 32], strides = [1, 1]} : vector<1x128xf32> to vector<1x32xf32>
    %194 = vector.extract_strided_slice %191 {offsets = [0, 32], sizes = [1, 32], strides = [1, 1]} : vector<1x128xf32> to vector<1x32xf32>
    %195 = vector.extract_strided_slice %192 {offsets = [0, 64], sizes = [1, 32], strides = [1, 1]} : vector<1x128xf32> to vector<1x32xf32>
    %196 = vector.extract_strided_slice %191 {offsets = [0, 96], sizes = [1, 32], strides = [1, 1]} : vector<1x128xf32> to vector<1x32xf32>
    %197 = arith.mulf %194, %167 : vector<1x32xf32>
    %198 = arith.mulf %193, %195 : vector<1x32xf32>
    %199 = arith.addf %197, %198 : vector<1x32xf32>
    %200 = math.tanh %199 : vector<1x32xf32>
    %201 = arith.mulf %196, %200 : vector<1x32xf32>
    %c0_42 = arith.constant 0 : index
    %c0_43 = arith.constant 0 : index
    %202 = vector.load %arg14[%c0_42, %c0_43] : memref<8x32xf32, #tpu.memory_space<vmem>>, vector<1x32xf32>
    tpu.vector_store %arg14[%c0_42, %c0_43], %201 {strides = array<i32>} : memref<8x32xf32, #tpu.memory_space<vmem>>, vector<1x32xf32>,
    %203 = vector.extract_strided_slice %182 {offsets = [1, 0], sizes = [1, 128], strides = [1, 1]} : vector<8x128xf32> to vector<1x128xf32>
    %204 = arith.truncf %201 : vector<1x32xf32> to vector<1x32xbf16>
    %cst_44 = arith.constant dense<0.000000e+00> : vector<1x128xf32>
    %205 = tpu.matmul %204, %1, %cst_44 {dimension_numbers = #tpu.dot_dimension_numbers<[1], [0], [0], [1], [0, 0, 1, 1], [], []>} : vector<1x32xbf16>, vector<32x128xbf16>, vector<1x128xf32> -> vector<1x128xf32>
    %206 = arith.addf %203, %205 : vector<1x128xf32>
    %207 = arith.negf %206 : vector<1x128xf32>
    %208 = math.exp %207 : vector<1x128xf32>
    %cst_45 = arith.constant 1.000000e+00 : f32
    %209 = vector.broadcast %cst_45 : f32 to vector<1x128xf32>
    %210 = arith.addf %209, %208 : vector<1x128xf32>
    %211 = arith.divf %209, %210 : vector<1x128xf32>
    %212 = math.tanh %206 : vector<1x128xf32>
    %213 = vector.extract_strided_slice %211 {offsets = [0, 0], sizes = [1, 32], strides = [1, 1]} : vector<1x128xf32> to vector<1x32xf32>
    %214 = vector.extract_strided_slice %211 {offsets = [0, 32], sizes = [1, 32], strides = [1, 1]} : vector<1x128xf32> to vector<1x32xf32>
    %215 = vector.extract_strided_slice %212 {offsets = [0, 64], sizes = [1, 32], strides = [1, 1]} : vector<1x128xf32> to vector<1x32xf32>
    %216 = vector.extract_strided_slice %211 {offsets = [0, 96], sizes = [1, 32], strides = [1, 1]} : vector<1x128xf32> to vector<1x32xf32>
    %217 = arith.mulf %214, %199 : vector<1x32xf32>
    %218 = arith.mulf %213, %215 : vector<1x32xf32>
    %219 = arith.addf %217, %218 : vector<1x32xf32>
    %220 = math.tanh %219 : vector<1x32xf32>
    %221 = arith.mulf %216, %220 : vector<1x32xf32>
    %c1 = arith.constant 1 : index
    %c0_46 = arith.constant 0 : index
    %222 = vector.load %arg14[%c1, %c0_46] : memref<8x32xf32, #tpu.memory_space<vmem>>, vector<1x32xf32>
    tpu.vector_store %arg14[%c1, %c0_46], %221 {strides = array<i32>} : memref<8x32xf32, #tpu.memory_space<vmem>>, vector<1x32xf32>,
    %223 = vector.extract_strided_slice %182 {offsets = [2, 0], sizes = [1, 128], strides = [1, 1]} : vector<8x128xf32> to vector<1x128xf32>
    %224 = arith.truncf %221 : vector<1x32xf32> to vector<1x32xbf16>
    %cst_47 = arith.constant dense<0.000000e+00> : vector<1x128xf32>
    %225 = tpu.matmul %224, %1, %cst_47 {dimension_numbers = #tpu.dot_dimension_numbers<[1], [0], [0], [1], [0, 0, 1, 1], [], []>} : vector<1x32xbf16>, vector<32x128xbf16>, vector<1x128xf32> -> vector<1x128xf32>
    %226 = arith.addf %223, %225 : vector<1x128xf32>
    %227 = arith.negf %226 : vector<1x128xf32>
    %228 = math.exp %227 : vector<1x128xf32>
    %cst_48 = arith.constant 1.000000e+00 : f32
    %229 = vector.broadcast %cst_48 : f32 to vector<1x128xf32>
    %230 = arith.addf %229, %228 : vector<1x128xf32>
    %231 = arith.divf %229, %230 : vector<1x128xf32>
    %232 = math.tanh %226 : vector<1x128xf32>
    %233 = vector.extract_strided_slice %231 {offsets = [0, 0], sizes = [1, 32], strides = [1, 1]} : vector<1x128xf32> to vector<1x32xf32>
    %234 = vector.extract_strided_slice %231 {offsets = [0, 32], sizes = [1, 32], strides = [1, 1]} : vector<1x128xf32> to vector<1x32xf32>
    %235 = vector.extract_strided_slice %232 {offsets = [0, 64], sizes = [1, 32], strides = [1, 1]} : vector<1x128xf32> to vector<1x32xf32>
    %236 = vector.extract_strided_slice %231 {offsets = [0, 96], sizes = [1, 32], strides = [1, 1]} : vector<1x128xf32> to vector<1x32xf32>
    %237 = arith.mulf %234, %219 : vector<1x32xf32>
    %238 = arith.mulf %233, %235 : vector<1x32xf32>
    %239 = arith.addf %237, %238 : vector<1x32xf32>
    %240 = math.tanh %239 : vector<1x32xf32>
    %241 = arith.mulf %236, %240 : vector<1x32xf32>
    %c2 = arith.constant 2 : index
    %c0_49 = arith.constant 0 : index
    %242 = vector.load %arg14[%c2, %c0_49] : memref<8x32xf32, #tpu.memory_space<vmem>>, vector<1x32xf32>
    tpu.vector_store %arg14[%c2, %c0_49], %241 {strides = array<i32>} : memref<8x32xf32, #tpu.memory_space<vmem>>, vector<1x32xf32>,
    %243 = vector.extract_strided_slice %182 {offsets = [3, 0], sizes = [1, 128], strides = [1, 1]} : vector<8x128xf32> to vector<1x128xf32>
    %244 = arith.truncf %241 : vector<1x32xf32> to vector<1x32xbf16>
    %cst_50 = arith.constant dense<0.000000e+00> : vector<1x128xf32>
    %245 = tpu.matmul %244, %1, %cst_50 {dimension_numbers = #tpu.dot_dimension_numbers<[1], [0], [0], [1], [0, 0, 1, 1], [], []>} : vector<1x32xbf16>, vector<32x128xbf16>, vector<1x128xf32> -> vector<1x128xf32>
    %246 = arith.addf %243, %245 : vector<1x128xf32>
    %247 = arith.negf %246 : vector<1x128xf32>
    %248 = math.exp %247 : vector<1x128xf32>
    %cst_51 = arith.constant 1.000000e+00 : f32
    %249 = vector.broadcast %cst_51 : f32 to vector<1x128xf32>
    %250 = arith.addf %249, %248 : vector<1x128xf32>
    %251 = arith.divf %249, %250 : vector<1x128xf32>
    %252 = math.tanh %246 : vector<1x128xf32>
    %253 = vector.extract_strided_slice %251 {offsets = [0, 0], sizes = [1, 32], strides = [1, 1]} : vector<1x128xf32> to vector<1x32xf32>
    %254 = vector.extract_strided_slice %251 {offsets = [0, 32], sizes = [1, 32], strides = [1, 1]} : vector<1x128xf32> to vector<1x32xf32>
    %255 = vector.extract_strided_slice %252 {offsets = [0, 64], sizes = [1, 32], strides = [1, 1]} : vector<1x128xf32> to vector<1x32xf32>
    %256 = vector.extract_strided_slice %251 {offsets = [0, 96], sizes = [1, 32], strides = [1, 1]} : vector<1x128xf32> to vector<1x32xf32>
    %257 = arith.mulf %254, %239 : vector<1x32xf32>
    %258 = arith.mulf %253, %255 : vector<1x32xf32>
    %259 = arith.addf %257, %258 : vector<1x32xf32>
    %260 = math.tanh %259 : vector<1x32xf32>
    %261 = arith.mulf %256, %260 : vector<1x32xf32>
    %c3 = arith.constant 3 : index
    %c0_52 = arith.constant 0 : index
    %262 = vector.load %arg14[%c3, %c0_52] : memref<8x32xf32, #tpu.memory_space<vmem>>, vector<1x32xf32>
    tpu.vector_store %arg14[%c3, %c0_52], %261 {strides = array<i32>} : memref<8x32xf32, #tpu.memory_space<vmem>>, vector<1x32xf32>,
    %263 = vector.extract_strided_slice %182 {offsets = [4, 0], sizes = [1, 128], strides = [1, 1]} : vector<8x128xf32> to vector<1x128xf32>
    %264 = arith.truncf %261 : vector<1x32xf32> to vector<1x32xbf16>
    %cst_53 = arith.constant dense<0.000000e+00> : vector<1x128xf32>
    %265 = tpu.matmul %264, %1, %cst_53 {dimension_numbers = #tpu.dot_dimension_numbers<[1], [0], [0], [1], [0, 0, 1, 1], [], []>} : vector<1x32xbf16>, vector<32x128xbf16>, vector<1x128xf32> -> vector<1x128xf32>
    %266 = arith.addf %263, %265 : vector<1x128xf32>
    %267 = arith.negf %266 : vector<1x128xf32>
    %268 = math.exp %267 : vector<1x128xf32>
    %cst_54 = arith.constant 1.000000e+00 : f32
    %269 = vector.broadcast %cst_54 : f32 to vector<1x128xf32>
    %270 = arith.addf %269, %268 : vector<1x128xf32>
    %271 = arith.divf %269, %270 : vector<1x128xf32>
    %272 = math.tanh %266 : vector<1x128xf32>
    %273 = vector.extract_strided_slice %271 {offsets = [0, 0], sizes = [1, 32], strides = [1, 1]} : vector<1x128xf32> to vector<1x32xf32>
    %274 = vector.extract_strided_slice %271 {offsets = [0, 32], sizes = [1, 32], strides = [1, 1]} : vector<1x128xf32> to vector<1x32xf32>
    %275 = vector.extract_strided_slice %272 {offsets = [0, 64], sizes = [1, 32], strides = [1, 1]} : vector<1x128xf32> to vector<1x32xf32>
    %276 = vector.extract_strided_slice %271 {offsets = [0, 96], sizes = [1, 32], strides = [1, 1]} : vector<1x128xf32> to vector<1x32xf32>
    %277 = arith.mulf %274, %259 : vector<1x32xf32>
    %278 = arith.mulf %273, %275 : vector<1x32xf32>
    %279 = arith.addf %277, %278 : vector<1x32xf32>
    %280 = math.tanh %279 : vector<1x32xf32>
    %281 = arith.mulf %276, %280 : vector<1x32xf32>
    %c4 = arith.constant 4 : index
    %c0_55 = arith.constant 0 : index
    %282 = vector.load %arg14[%c4, %c0_55] : memref<8x32xf32, #tpu.memory_space<vmem>>, vector<1x32xf32>
    tpu.vector_store %arg14[%c4, %c0_55], %281 {strides = array<i32>} : memref<8x32xf32, #tpu.memory_space<vmem>>, vector<1x32xf32>,
    %283 = vector.extract_strided_slice %182 {offsets = [5, 0], sizes = [1, 128], strides = [1, 1]} : vector<8x128xf32> to vector<1x128xf32>
    %284 = arith.truncf %281 : vector<1x32xf32> to vector<1x32xbf16>
    %cst_56 = arith.constant dense<0.000000e+00> : vector<1x128xf32>
    %285 = tpu.matmul %284, %1, %cst_56 {dimension_numbers = #tpu.dot_dimension_numbers<[1], [0], [0], [1], [0, 0, 1, 1], [], []>} : vector<1x32xbf16>, vector<32x128xbf16>, vector<1x128xf32> -> vector<1x128xf32>
    %286 = arith.addf %283, %285 : vector<1x128xf32>
    %287 = arith.negf %286 : vector<1x128xf32>
    %288 = math.exp %287 : vector<1x128xf32>
    %cst_57 = arith.constant 1.000000e+00 : f32
    %289 = vector.broadcast %cst_57 : f32 to vector<1x128xf32>
    %290 = arith.addf %289, %288 : vector<1x128xf32>
    %291 = arith.divf %289, %290 : vector<1x128xf32>
    %292 = math.tanh %286 : vector<1x128xf32>
    %293 = vector.extract_strided_slice %291 {offsets = [0, 0], sizes = [1, 32], strides = [1, 1]} : vector<1x128xf32> to vector<1x32xf32>
    %294 = vector.extract_strided_slice %291 {offsets = [0, 32], sizes = [1, 32], strides = [1, 1]} : vector<1x128xf32> to vector<1x32xf32>
    %295 = vector.extract_strided_slice %292 {offsets = [0, 64], sizes = [1, 32], strides = [1, 1]} : vector<1x128xf32> to vector<1x32xf32>
    %296 = vector.extract_strided_slice %291 {offsets = [0, 96], sizes = [1, 32], strides = [1, 1]} : vector<1x128xf32> to vector<1x32xf32>
    %297 = arith.mulf %294, %279 : vector<1x32xf32>
    %298 = arith.mulf %293, %295 : vector<1x32xf32>
    %299 = arith.addf %297, %298 : vector<1x32xf32>
    %300 = math.tanh %299 : vector<1x32xf32>
    %301 = arith.mulf %296, %300 : vector<1x32xf32>
    %c5 = arith.constant 5 : index
    %c0_58 = arith.constant 0 : index
    %302 = vector.load %arg14[%c5, %c0_58] : memref<8x32xf32, #tpu.memory_space<vmem>>, vector<1x32xf32>
    tpu.vector_store %arg14[%c5, %c0_58], %301 {strides = array<i32>} : memref<8x32xf32, #tpu.memory_space<vmem>>, vector<1x32xf32>,
    %303 = vector.extract_strided_slice %182 {offsets = [6, 0], sizes = [1, 128], strides = [1, 1]} : vector<8x128xf32> to vector<1x128xf32>
    %304 = arith.truncf %301 : vector<1x32xf32> to vector<1x32xbf16>
    %cst_59 = arith.constant dense<0.000000e+00> : vector<1x128xf32>
    %305 = tpu.matmul %304, %1, %cst_59 {dimension_numbers = #tpu.dot_dimension_numbers<[1], [0], [0], [1], [0, 0, 1, 1], [], []>} : vector<1x32xbf16>, vector<32x128xbf16>, vector<1x128xf32> -> vector<1x128xf32>
    %306 = arith.addf %303, %305 : vector<1x128xf32>
    %307 = arith.negf %306 : vector<1x128xf32>
    %308 = math.exp %307 : vector<1x128xf32>
    %cst_60 = arith.constant 1.000000e+00 : f32
    %309 = vector.broadcast %cst_60 : f32 to vector<1x128xf32>
    %310 = arith.addf %309, %308 : vector<1x128xf32>
    %311 = arith.divf %309, %310 : vector<1x128xf32>
    %312 = math.tanh %306 : vector<1x128xf32>
    %313 = vector.extract_strided_slice %311 {offsets = [0, 0], sizes = [1, 32], strides = [1, 1]} : vector<1x128xf32> to vector<1x32xf32>
    %314 = vector.extract_strided_slice %311 {offsets = [0, 32], sizes = [1, 32], strides = [1, 1]} : vector<1x128xf32> to vector<1x32xf32>
    %315 = vector.extract_strided_slice %312 {offsets = [0, 64], sizes = [1, 32], strides = [1, 1]} : vector<1x128xf32> to vector<1x32xf32>
    %316 = vector.extract_strided_slice %311 {offsets = [0, 96], sizes = [1, 32], strides = [1, 1]} : vector<1x128xf32> to vector<1x32xf32>
    %317 = arith.mulf %314, %299 : vector<1x32xf32>
    %318 = arith.mulf %313, %315 : vector<1x32xf32>
    %319 = arith.addf %317, %318 : vector<1x32xf32>
    %320 = math.tanh %319 : vector<1x32xf32>
    %321 = arith.mulf %316, %320 : vector<1x32xf32>
    %c6 = arith.constant 6 : index
    %c0_61 = arith.constant 0 : index
    %322 = vector.load %arg14[%c6, %c0_61] : memref<8x32xf32, #tpu.memory_space<vmem>>, vector<1x32xf32>
    tpu.vector_store %arg14[%c6, %c0_61], %321 {strides = array<i32>} : memref<8x32xf32, #tpu.memory_space<vmem>>, vector<1x32xf32>,
    %323 = vector.extract_strided_slice %182 {offsets = [7, 0], sizes = [1, 128], strides = [1, 1]} : vector<8x128xf32> to vector<1x128xf32>
    %324 = arith.truncf %321 : vector<1x32xf32> to vector<1x32xbf16>
    %cst_62 = arith.constant dense<0.000000e+00> : vector<1x128xf32>
    %325 = tpu.matmul %324, %1, %cst_62 {dimension_numbers = #tpu.dot_dimension_numbers<[1], [0], [0], [1], [0, 0, 1, 1], [], []>} : vector<1x32xbf16>, vector<32x128xbf16>, vector<1x128xf32> -> vector<1x128xf32>
    %326 = arith.addf %323, %325 : vector<1x128xf32>
    %327 = arith.negf %326 : vector<1x128xf32>
    %328 = math.exp %327 : vector<1x128xf32>
    %cst_63 = arith.constant 1.000000e+00 : f32
    %329 = vector.broadcast %cst_63 : f32 to vector<1x128xf32>
    %330 = arith.addf %329, %328 : vector<1x128xf32>
    %331 = arith.divf %329, %330 : vector<1x128xf32>
    %332 = math.tanh %326 : vector<1x128xf32>
    %333 = vector.extract_strided_slice %331 {offsets = [0, 0], sizes = [1, 32], strides = [1, 1]} : vector<1x128xf32> to vector<1x32xf32>
    %334 = vector.extract_strided_slice %331 {offsets = [0, 32], sizes = [1, 32], strides = [1, 1]} : vector<1x128xf32> to vector<1x32xf32>
    %335 = vector.extract_strided_slice %332 {offsets = [0, 64], sizes = [1, 32], strides = [1, 1]} : vector<1x128xf32> to vector<1x32xf32>
    %336 = vector.extract_strided_slice %331 {offsets = [0, 96], sizes = [1, 32], strides = [1, 1]} : vector<1x128xf32> to vector<1x32xf32>
    %337 = arith.mulf %334, %319 : vector<1x32xf32>
    %338 = arith.mulf %333, %335 : vector<1x32xf32>
    %339 = arith.addf %337, %338 : vector<1x32xf32>
    %340 = math.tanh %339 : vector<1x32xf32>
    %341 = arith.mulf %336, %340 : vector<1x32xf32>
    %c7 = arith.constant 7 : index
    %c0_64 = arith.constant 0 : index
    %342 = vector.load %arg14[%c7, %c0_64] : memref<8x32xf32, #tpu.memory_space<vmem>>, vector<1x32xf32>
    tpu.vector_store %arg14[%c7, %c0_64], %341 {strides = array<i32>} : memref<8x32xf32, #tpu.memory_space<vmem>>, vector<1x32xf32>,
    %c0_65 = arith.constant 0 : index
    %c0_66 = arith.constant 0 : index
    %343 = vector.load %arg14[%c0_65, %c0_66] : memref<8x32xf32, #tpu.memory_space<vmem>>, vector<8x32xf32>
    %c0_67 = arith.constant 0 : index
    %c0_68 = arith.constant 0 : index
    %344 = vector.load %arg11[%c0_67, %c0_68] : memref<32x128xf32, #tpu.memory_space<vmem>>, vector<32x128xf32>
    %cst_69 = arith.constant dense<0.000000e+00> : vector<8x128xf32>
    %345 = tpu.matmul %343, %344, %cst_69 {dimension_numbers = #tpu.dot_dimension_numbers<[1], [0], [0], [1], [0, 0, 1, 1], [], []>} : vector<8x32xf32>, vector<32x128xf32>, vector<8x128xf32> -> vector<8x128xf32>
    %c0_70 = arith.constant 0 : index
    %c0_71 = arith.constant 0 : index
    %346 = vector.load %arg12[%c0_70, %c0_71] : memref<1x128xf32, #tpu.memory_space<vmem>>, vector<1x128xf32>
    %347 = vector.broadcast %346 : vector<1x128xf32> to vector<8x128xf32>
    %348 = arith.addf %345, %347 : vector<8x128xf32>
    %c0_72 = arith.constant 0 : index
    %c0_73 = arith.constant 0 : index
    %349 = vector.load %arg13[%c0_72, %c0_73] : memref<8x128xf32, #tpu.memory_space<vmem>>, vector<8x128xf32>
    tpu.vector_store %arg13[%c0_72, %c0_73], %348 {strides = array<i32>} : memref<8x128xf32, #tpu.memory_space<vmem>>, vector<8x128xf32>,
    return
  }
  func.func @transform_0(%arg0: i32) -> (i32, i32) {
    %c0_i32 = arith.constant 0 : i32
    %c0_i32_0 = arith.constant 0 : i32
    %c0_i32_1 = arith.constant 0 : i32
    return %c0_i32, %c0_i32_0 : i32, i32
  }
  func.func @transform_1(%arg0: i32) -> (i32, i32) {
    %c0_i32 = arith.constant 0 : i32
    %c0_i32_0 = arith.constant 0 : i32
    %c0_i32_1 = arith.constant 0 : i32
    return %c0_i32, %c0_i32_0 : i32, i32
  }
  func.func @transform_2(%arg0: i32) -> (i32, i32) {
    %c0_i32 = arith.constant 0 : i32
    %c0_i32_0 = arith.constant 0 : i32
    %c0_i32_1 = arith.constant 0 : i32
    return %c0_i32, %c0_i32_0 : i32, i32
  }
  func.func @transform_3(%arg0: i32) -> (i32, i32) {
    %c0_i32 = arith.constant 0 : i32
    %c0_i32_0 = arith.constant 0 : i32
    %c0_i32_1 = arith.constant 0 : i32
    return %c0_i32, %c0_i32_0 : i32, i32
  }
  func.func @transform_4(%arg0: i32) -> (i32, i32) {
    %c0_i32 = arith.constant 0 : i32
    %c0_i32_0 = arith.constant 0 : i32
    %c0_i32_1 = arith.constant 0 : i32
    return %c0_i32, %c0_i32_0 : i32, i32
  }
  func.func @transform_5(%arg0: i32) -> (i32, i32) {
    %c0_i32 = arith.constant 0 : i32
    %c0_i32_0 = arith.constant 0 : i32
    %c0_i32_1 = arith.constant 0 : i32
    return %c0_i32, %c0_i32_0 : i32, i32
  }
  func.func @transform_6(%arg0: i32) -> (i32, i32) {
    %c0_i32 = arith.constant 0 : i32
    %c0_i32_0 = arith.constant 0 : i32
    %c0_i32_1 = arith.constant 0 : i32
    return %c0_i32, %c0_i32_0 : i32, i32
  }
  func.func @transform_7(%arg0: i32) -> (i32, i32) {
    %c0_i32 = arith.constant 0 : i32
    %c0_i32_0 = arith.constant 0 : i32
    %c0_i32_1 = arith.constant 0 : i32
    return %c0_i32, %c0_i32_0 : i32, i32
  }
  func.func @transform_8(%arg0: i32) -> (i32, i32) {
    %c0_i32 = arith.constant 0 : i32
    %c0_i32_0 = arith.constant 0 : i32
    %c0_i32_1 = arith.constant 0 : i32
    return %c0_i32, %c0_i32_0 : i32, i32
  }
  func.func @transform_9(%arg0: i32) -> (i32, i32) {
    %c0_i32 = arith.constant 0 : i32
    %c0_i32_0 = arith.constant 0 : i32
    %c0_i32_1 = arith.constant 0 : i32
    return %c0_i32, %c0_i32_0 : i32, i32
  }
  func.func @transform_10(%arg0: i32) -> (i32, i32) {
    %c0_i32 = arith.constant 0 : i32
    %c0_i32_0 = arith.constant 0 : i32
    %c0_i32_1 = arith.constant 0 : i32
    return %c0_i32, %c0_i32_0 : i32, i32
  }
  func.func @transform_11(%arg0: i32) -> (i32, i32) {
    %c0_i32 = arith.constant 0 : i32
    %c0_i32_0 = arith.constant 0 : i32
    %c0_i32_1 = arith.constant 0 : i32
    return %c0_i32, %c0_i32_0 : i32, i32
  }
  func.func @transform_12(%arg0: i32) -> (i32, i32) {
    %c0_i32 = arith.constant 0 : i32
    %c0_i32_0 = arith.constant 0 : i32
    %c0_i32_1 = arith.constant 0 : i32
    return %c0_i32, %c0_i32_0 : i32, i32
  }
}

</mosaic_0001>

<llo_original>
// kernel: model_forward.1
$region0: #{model_forward.1}
  #allocation0 [shape = 'u32[]', space=smem, size = 0x4, offset = 0x4, fixed_abs, tag = 'smem constant byte address 0x4 - core index']
  #allocation1 [shape = 'u32[144,128]{1,0:T(1,128)}', space=vmem, size = 0x12000, scoped, tag = 'internal scratch']
  #allocation2 [shape = 'f32[8,32]{1,0:T(8,128)}', space=vmem, size = 0x1000, scoped, tag = 'scratch operand']
  %s0 = inlined_call_operand.vmem [shape: bf16[8,32], index: 0, kind: input, shape index: {}]
  %s1 = inlined_call_operand.vmem [shape: bf16[8,32], index: 1, kind: input, shape index: {}]
  %s2 = inlined_call_operand.vmem [shape: bf16[32,128], index: 2, kind: input, shape index: {}]
  %s3 = inlined_call_operand.vmem [shape: bf16[32,128], index: 3, kind: input, shape index: {}]
  %s4 = inlined_call_operand.vmem [shape: f32[1,128], index: 4, kind: input, shape index: {}]
  %s5 = inlined_call_operand.vmem [shape: bf16[32,128], index: 5, kind: input, shape index: {}]
  %s6 = inlined_call_operand.vmem [shape: f32[1,128], index: 6, kind: input, shape index: {}]
  %s7 = inlined_call_operand.vmem [shape: bf16[32,128], index: 7, kind: input, shape index: {}]
  %s8 = inlined_call_operand.vmem [shape: f32[32,128], index: 8, kind: input, shape index: {}]
  %s9 = inlined_call_operand.vmem [shape: f32[1,128], index: 9, kind: input, shape index: {}]
  %s10 = inlined_call_operand.vmem [shape: f32[32,128], index: 10, kind: input, shape index: {}]
  %s11 = inlined_call_operand.vmem [shape: f32[1,128], index: 11, kind: input, shape index: {}]
  %s12 = inlined_call_operand.vmem [shape: f32[8,128], index: 12, kind: output, shape index: {}]
  %s13 = sld [smem:[#allocation0]]
  $region58: #{model_forward.1} parent=0
    _
  %s15 = ssub.s32 1, %s13
  %s16 = scalar_select 0, %s15, %s13
  // Predicated region
  $region2: #{model_forward.1} parent=0 // pred_check
    _
  $region3: #{model_forward.1} parent=0 // pred_check_branch
    %18 = sbr.rel (0) target = $region5
  $region4: #{model_forward.1} parent=0 // pred_region
    _
  $region5: #{model_forward.1} parent=0 // pred_fallthru
    _
  // Predicated region
  $region6: #{model_forward.1} parent=0 // pred_check
    _
  $region7: #{model_forward.1} parent=0 // pred_check_branch
    %20 = sbr.rel (0) target = $region9
  $region8: #{model_forward.1} parent=0 // pred_region
    _
  $region9: #{model_forward.1} parent=0 // pred_fallthru
    _
  // Predicated region
  $region10: #{model_forward.1} parent=0 // pred_check
    _
  $region11: #{model_forward.1} parent=0 // pred_check_branch
    %22 = sbr.rel (0) target = $region13
  $region12: #{model_forward.1} parent=0 // pred_region
    _
  $region13: #{model_forward.1} parent=0 // pred_fallthru
    _
  // Predicated region
  $region14: #{model_forward.1} parent=0 // pred_check
    _
  $region15: #{model_forward.1} parent=0 // pred_check_branch
    %24 = sbr.rel (0) target = $region17
  $region16: #{model_forward.1} parent=0 // pred_region
    _
  $region17: #{model_forward.1} parent=0 // pred_fallthru
    _
  // Predicated region
  $region18: #{model_forward.1} parent=0 // pred_check
    _
  $region19: #{model_forward.1} parent=0 // pred_check_branch
    %26 = sbr.rel (0) target = $region21
  $region20: #{model_forward.1} parent=0 // pred_region
    _
  $region21: #{model_forward.1} parent=0 // pred_fallthru
    _
  // Predicated region
  $region22: #{model_forward.1} parent=0 // pred_check
    _
  $region23: #{model_forward.1} parent=0 // pred_check_branch
    %28 = sbr.rel (0) target = $region25
  $region24: #{model_forward.1} parent=0 // pred_region
    _
  $region25: #{model_forward.1} parent=0 // pred_fallthru
    _
  // Predicated region
  $region26: #{model_forward.1} parent=0 // pred_check
    _
  $region27: #{model_forward.1} parent=0 // pred_check_branch
    %30 = sbr.rel (0) target = $region29
  $region28: #{model_forward.1} parent=0 // pred_region
    _
  $region29: #{model_forward.1} parent=0 // pred_fallthru
    _
  // Predicated region
  $region30: #{model_forward.1} parent=0 // pred_check
    _
  $region31: #{model_forward.1} parent=0 // pred_check_branch
    %32 = sbr.rel (0) target = $region33
  $region32: #{model_forward.1} parent=0 // pred_region
    _
  $region33: #{model_forward.1} parent=0 // pred_fallthru
    _
  // Predicated region
  $region34: #{model_forward.1} parent=0 // pred_check
    _
  $region35: #{model_forward.1} parent=0 // pred_check_branch
    %34 = sbr.rel (0) target = $region37
  $region36: #{model_forward.1} parent=0 // pred_region
    _
  $region37: #{model_forward.1} parent=0 // pred_fallthru
    _
  // Predicated region
  $region38: #{model_forward.1} parent=0 // pred_check
    _
  $region39: #{model_forward.1} parent=0 // pred_check_branch
    %36 = sbr.rel (0) target = $region41
  $region40: #{model_forward.1} parent=0 // pred_region
    _
  $region41: #{model_forward.1} parent=0 // pred_fallthru
    _
  // Predicated region
  $region42: #{model_forward.1} parent=0 // pred_check
    _
  $region43: #{model_forward.1} parent=0 // pred_check_branch
    %38 = sbr.rel (0) target = $region45
  $region44: #{model_forward.1} parent=0 // pred_region
    _
  $region45: #{model_forward.1} parent=0 // pred_fallthru
    _
  // Predicated region
  $region46: #{model_forward.1} parent=0 // pred_check
    _
  $region47: #{model_forward.1} parent=0 // pred_check_branch
    %40 = sbr.rel (0) target = $region49
  $region48: #{model_forward.1} parent=0 // pred_region
    _
  $region49: #{model_forward.1} parent=0 // pred_fallthru
    _
  %v42 = vld [vmem:[%s3] sm:$0xf]
  %v43 = vld [vmem:[%s3 + $0x4] sm:$0xf]
  %v44 = vld [vmem:[%s3 + $0x8] sm:$0xf]
  %v45 = vld [vmem:[%s3 + $0xc] sm:$0xf]
  %v46 = vld [vmem:[%s7] sm:$0xf]
  %v47 = vld [vmem:[%s7 + $0x4] sm:$0xf]
  %v48 = vld [vmem:[%s7 + $0x8] sm:$0xf]
  %v49 = vld [vmem:[%s7 + $0xc] sm:$0xf]
  %v50 = vld [vmem:[%s0] sm:$0xf]
  %v51 = vld [vmem:[%s2] sm:$0xf]
  %v52 = vld [vmem:[%s2 + $0x4] sm:$0xf]
  %v53 = vld [vmem:[%s2 + $0x8] sm:$0xf]
  %v54 = vld [vmem:[%s2 + $0xc] sm:$0xf]
  %v55 = vld [vmem:[%s4] sm:$0x1]
  %v57 = vlaneseq
  %v58 = vshrl.u32 %v57, 7
  %v59 = vsub.s32 0, %v58
  %v60 = vrot.slane %v55, %v59
  %v66 = vunpack.c.l.b16 %v51
  %v67 = vunpack.c.l.b16 %v52
  %v68 = vunpack.c.l.b16 %v53
  %v69 = vunpack.c.l.b16 %v54
  %v70 = vpack.c.b16 %v67, %v66
  %v71 = vpack.c.b16 %v69, %v68
  %vm74 = vcmask 261120
  %v76 = vsel %vm74, %v50, 0
  %78 = vmatprep.subr.bf16.mxu0 0
  %79 = vmatpush1.bf16.msra.mxu0 %v70
  %80 = vmatprep.subr.bf16.mxu0 0
  %81 = vmatpush1.bf16.msra.mxu0 %v71
  %82 = vmatprep.subr.bf16.mxu0 0
  %83 = vmatpush1.bf16.msra.mxu0 0
  %84 = vmatprep.subr.bf16.mxu0 0
  %85 = vmatpush1.bf16.msra.mxu0 0
  %86 = vmatprep.subr.bf16.mxu0 0
  %87 = vmatpush1.bf16.msra.mxu0 0
  %88 = vmatprep.subr.bf16.mxu0 0
  %89 = vmatpush1.bf16.msra.mxu0 0
  %90 = vmatprep.subr.bf16.mxu0 0
  %91 = vmatpush1.bf16.msra.mxu0 0
  %92 = vmatprep.subr.bf16.mxu0 0
  %93 = vmatpush1.bf16.msra.mxu0 0
  %94 = vmatprep.subr.bf16.mxu0 0
  %95 = vmatpush1.bf16.msra.mxu0 0
  %96 = vmatprep.subr.bf16.mxu0 0
  %97 = vmatpush1.bf16.msra.mxu0 0
  %98 = vmatprep.subr.bf16.mxu0 0
  %99 = vmatpush1.bf16.msra.mxu0 0
  %100 = vmatprep.subr.bf16.mxu0 0
  %101 = vmatpush1.bf16.msra.mxu0 0
  %102 = vmatprep.subr.bf16.mxu0 0
  %103 = vmatpush1.bf16.msra.mxu0 0
  %104 = vmatprep.subr.bf16.mxu0 0
  %105 = vmatpush1.bf16.msra.mxu0 0
  %106 = vmatprep.subr.bf16.mxu0 0
  %107 = vmatpush1.bf16.msra.mxu0 0
  %108 = vmatprep.subr.bf16.mxu0 0
  %109 = vmatpush1.bf16.msra.mxu0 0
  %110 = vmatprep.mubr.bf16.mxu0 0
  %111 = vmatmul.mubr.bf16.gmra.mrb[0].mxu0 %v76
  %v112 = vpop.f32.mrb[0].mxu0
  %v113 = vadd.f32 %v60, %v112
  %v114 = vpop.f32.mrb[0].mxu0
  %v115 = vpop.f32.mrb[0].mxu0
  %v116 = vpop.f32.mrb[0].mxu0
  %117 = vdwg.mxu0
  %v122 = vunpack.c.l.b16 %v42
  %v123 = vunpack.c.l.b16 %v43
  %v124 = vunpack.c.l.b16 %v44
  %v125 = vunpack.c.l.b16 %v45
  %v126 = vpack.c.b16 %v123, %v122
  %v127 = vpack.c.b16 %v125, %v124
  %v131 = vsel %vm74, 0, 0
  %133 = vmatprep.subr.bf16.mxu0 0
  %134 = vmatpush1.bf16.msra.mxu0 %v126
  %135 = vmatprep.subr.bf16.mxu0 0
  %136 = vmatpush1.bf16.msra.mxu0 %v127
  %137 = vmatprep.subr.bf16.mxu0 0
  %138 = vmatpush1.bf16.msra.mxu0 0
  %139 = vmatprep.subr.bf16.mxu0 0
  %140 = vmatpush1.bf16.msra.mxu0 0
  %141 = vmatprep.subr.bf16.mxu0 0
  %142 = vmatpush1.bf16.msra.mxu0 0
  %143 = vmatprep.subr.bf16.mxu0 0
  %144 = vmatpush1.bf16.msra.mxu0 0
  %145 = vmatprep.subr.bf16.mxu0 0
  %146 = vmatpush1.bf16.msra.mxu0 0
  %147 = vmatprep.subr.bf16.mxu0 0
  %148 = vmatpush1.bf16.msra.mxu0 0
  %149 = vmatprep.subr.bf16.mxu0 0
  %150 = vmatpush1.bf16.msra.mxu0 0
  %151 = vmatprep.subr.bf16.mxu0 0
  %152 = vmatpush1.bf16.msra.mxu0 0
  %153 = vmatprep.subr.bf16.mxu0 0
  %154 = vmatpush1.bf16.msra.mxu0 0
  %155 = vmatprep.subr.bf16.mxu0 0
  %156 = vmatpush1.bf16.msra.mxu0 0
  %157 = vmatprep.subr.bf16.mxu0 0
  %158 = vmatpush1.bf16.msra.mxu0 0
  %159 = vmatprep.subr.bf16.mxu0 0
  %160 = vmatpush1.bf16.msra.mxu0 0
  %161 = vmatprep.subr.bf16.mxu0 0
  %162 = vmatpush1.bf16.msra.mxu0 0
  %163 = vmatprep.subr.bf16.mxu0 0
  %164 = vmatpush1.bf16.msra.mxu0 0
  %165 = vmatprep.mubr.bf16.mxu0 0
  %166 = vmatmul.mubr.bf16.gmra.mrb[0].mxu0 %v131
  %v167 = vpop.f32.mrb[0].mxu0
  %v168 = vadd.f32 0.0, %v167
  %v169 = vpop.f32.mrb[0].mxu0
  %v170 = vpop.f32.mrb[0].mxu0
  %v171 = vpop.f32.mrb[0].mxu0
  %172 = vdwg.mxu0
  %v173 = vadd.f32 %v113, %v168
  %v174 = vxor.u32 %v173, 2147483648
  %v175 = vmul.f32 %v174, 1.442695
  %v176 = vpow.pop %v175
  %v177 = vadd.f32 %v176, 1.0
  %v178 = vrcp.pop %v177
  %v179 = vmul.f32 1.0, %v178
  %v180 = vtanh.pop %v173
  %v181 = vmul.f32 %v179, 0.0
  %183 = vrot.lane.b32.xlu0 %v180, 64
  %v184 = vpop.permute.xlu0 %183
  %v186 = vmul.f32 %v179, %v184
  %188 = vrot.lane.b32.xlu0 %v186, 32
  %v189 = vpop.permute.xlu0 %188
  %v191 = vadd.f32 %v181, %v189
  %v192 = vtanh.pop %v191
  %194 = vrot.lane.b32.xlu0 %v192, 64
  %v195 = vpop.permute.xlu0 %194
  %v197 = vmul.f32 %v179, %v195
  %v198 = vadd.f32 %v197, 0.0
  %v199 = vpack.c.bf16 %v197, %v197
  %201 = vrot.lane.b32.xlu0 %v199, 32
  %v202 = vpop.permute.xlu0 %201
  %v204 = vsel %vm74, %v202, 0
  %206 = vmatprep.subr.bf16.mxu0 0
  %207 = vmatpush1.bf16.msra.mxu0 %v126
  %208 = vmatprep.subr.bf16.mxu0 0
  %209 = vmatpush1.bf16.msra.mxu0 %v127
  %210 = vmatprep.subr.bf16.mxu0 0
  %211 = vmatpush1.bf16.msra.mxu0 0
  %212 = vmatprep.subr.bf16.mxu0 0
  %213 = vmatpush1.bf16.msra.mxu0 0
  %214 = vmatprep.subr.bf16.mxu0 0
  %215 = vmatpush1.bf16.msra.mxu0 0
  %216 = vmatprep.subr.bf16.mxu0 0
  %217 = vmatpush1.bf16.msra.mxu0 0
  %218 = vmatprep.subr.bf16.mxu0 0
  %219 = vmatpush1.bf16.msra.mxu0 0
  %220 = vmatprep.subr.bf16.mxu0 0
  %221 = vmatpush1.bf16.msra.mxu0 0
  %222 = vmatprep.subr.bf16.mxu0 0
  %223 = vmatpush1.bf16.msra.mxu0 0
  %224 = vmatprep.subr.bf16.mxu0 0
  %225 = vmatpush1.bf16.msra.mxu0 0
  %226 = vmatprep.subr.bf16.mxu0 0
  %227 = vmatpush1.bf16.msra.mxu0 0
  %228 = vmatprep.subr.bf16.mxu0 0
  %229 = vmatpush1.bf16.msra.mxu0 0
  %230 = vmatprep.subr.bf16.mxu0 0
  %231 = vmatpush1.bf16.msra.mxu0 0
  %232 = vmatprep.subr.bf16.mxu0 0
  %233 = vmatpush1.bf16.msra.mxu0 0
  %234 = vmatprep.subr.bf16.mxu0 0
  %235 = vmatpush1.bf16.msra.mxu0 0
  %236 = vmatprep.subr.bf16.mxu0 0
  %237 = vmatpush1.bf16.msra.mxu0 0
  %238 = vmatprep.mubr.bf16.mxu0 0
  %239 = vmatmul.mubr.bf16.gmra.mrb[0].mxu0 %v204
  %v240 = vpop.f32.mrb[0].mxu0
  %v241 = vadd.f32 0.0, %v240
  %v242 = vpop.f32.mrb[0].mxu0
  %v243 = vpop.f32.mrb[0].mxu0
  %v244 = vpop.f32.mrb[0].mxu0
  %245 = vdwg.mxu0
  %v247 = vrot.slane %v241, 7
  %v249 = vadd.f32 %v113, %v247
  %v250 = vxor.u32 %v249, 2147483648
  %v251 = vmul.f32 %v250, 1.442695
  %v252 = vpow.pop %v251
  %v253 = vadd.f32 %v252, 1.0
  %v254 = vrcp.pop %v253
  %v255 = vmul.f32 1.0, %v254
  %v256 = vtanh.pop %v249
  %v258 = vrot.slane %v191, 7
  %v260 = vmul.f32 %v255, %v258
  %262 = vrot.lane.b32.xlu0 %v256, 64
  %v263 = vpop.permute.xlu0 %262
  %v265 = vmul.f32 %v255, %v263
  %267 = vrot.lane.b32.xlu0 %v265, 32
  %v268 = vpop.permute.xlu0 %267
  %v270 = vadd.f32 %v260, %v268
  %v271 = vtanh.pop %v270
  %273 = vrot.lane.b32.xlu0 %v271, 64
  %v274 = vpop.permute.xlu0 %273
  %v276 = vmul.f32 %v255, %v274
  %v278 = vrot.slane %v276, 1
  %v280 = vadd.f32 %v198, %v278
  %v281 = vpack.c.bf16 %v276, %v276
  %v283 = vshrl.u32 %v281, 16
  %285 = vrot.lane.b32.xlu0 %v283, 32
  %v286 = vpop.permute.xlu0 %285
  %v288 = vsel %vm74, %v286, 0
  %290 = vmatprep.subr.bf16.mxu0 0
  %291 = vmatpush1.bf16.msra.mxu0 %v126
  %292 = vmatprep.subr.bf16.mxu0 0
  %293 = vmatpush1.bf16.msra.mxu0 %v127
  %294 = vmatprep.subr.bf16.mxu0 0
  %295 = vmatpush1.bf16.msra.mxu0 0
  %296 = vmatprep.subr.bf16.mxu0 0
  %297 = vmatpush1.bf16.msra.mxu0 0
  %298 = vmatprep.subr.bf16.mxu0 0
  %299 = vmatpush1.bf16.msra.mxu0 0
  %300 = vmatprep.subr.bf16.mxu0 0
  %301 = vmatpush1.bf16.msra.mxu0 0
  %302 = vmatprep.subr.bf16.mxu0 0
  %303 = vmatpush1.bf16.msra.mxu0 0
  %304 = vmatprep.subr.bf16.mxu0 0
  %305 = vmatpush1.bf16.msra.mxu0 0
  %306 = vmatprep.subr.bf16.mxu0 0
  %307 = vmatpush1.bf16.msra.mxu0 0
  %308 = vmatprep.subr.bf16.mxu0 0
  %309 = vmatpush1.bf16.msra.mxu0 0
  %310 = vmatprep.subr.bf16.mxu0 0
  %311 = vmatpush1.bf16.msra.mxu0 0
  %312 = vmatprep.subr.bf16.mxu0 0
  %313 = vmatpush1.bf16.msra.mxu0 0
  %314 = vmatprep.subr.bf16.mxu0 0
  %315 = vmatpush1.bf16.msra.mxu0 0
  %316 = vmatprep.subr.bf16.mxu0 0
  %317 = vmatpush1.bf16.msra.mxu0 0
  %318 = vmatprep.subr.bf16.mxu0 0
  %319 = vmatpush1.bf16.msra.mxu0 0
  %320 = vmatprep.subr.bf16.mxu0 0
  %321 = vmatpush1.bf16.msra.mxu0 0
  %322 = vmatprep.mubr.bf16.mxu0 0
  %323 = vmatmul.mubr.bf16.gmra.mrb[0].mxu0 %v288
  %v324 = vpop.f32.mrb[0].mxu0
  %v325 = vadd.f32 0.0, %v324
  %v326 = vpop.f32.mrb[0].mxu0
  %v327 = vpop.f32.mrb[0].mxu0
  %v328 = vpop.f32.mrb[0].mxu0
  %329 = vdwg.mxu0
  %v331 = vrot.slane %v325, 6
  %v333 = vadd.f32 %v113, %v331
  %v334 = vxor.u32 %v333, 2147483648
  %v335 = vmul.f32 %v334, 1.442695
  %v336 = vpow.pop %v335
  %v337 = vadd.f32 %v336, 1.0
  %v338 = vrcp.pop %v337
  %v339 = vmul.f32 1.0, %v338
  %v340 = vtanh.pop %v333
  %v342 = vrot.slane %v270, 7
  %v344 = vmul.f32 %v339, %v342
  %346 = vrot.lane.b32.xlu0 %v340, 64
  %v347 = vpop.permute.xlu0 %346
  %v349 = vmul.f32 %v339, %v347
  %351 = vrot.lane.b32.xlu0 %v349, 32
  %v352 = vpop.permute.xlu0 %351
  %v354 = vadd.f32 %v344, %v352
  %v355 = vtanh.pop %v354
  %357 = vrot.lane.b32.xlu0 %v355, 64
  %v358 = vpop.permute.xlu0 %357
  %v360 = vmul.f32 %v339, %v358
  %v362 = vrot.slane %v360, 2
  %v364 = vadd.f32 %v280, %v362
  %v365 = vpack.c.bf16 %v360, %v360
  %v367 = vrot.slane %v365, 1
  %368 = vrot.lane.b32.xlu0 %v367, 32
  %v369 = vpop.permute.xlu0 %368
  %v371 = vsel %vm74, %v369, 0
  %373 = vmatprep.subr.bf16.mxu0 0
  %374 = vmatpush1.bf16.msra.mxu0 %v126
  %375 = vmatprep.subr.bf16.mxu0 0
  %376 = vmatpush1.bf16.msra.mxu0 %v127
  %377 = vmatprep.subr.bf16.mxu0 0
  %378 = vmatpush1.bf16.msra.mxu0 0
  %379 = vmatprep.subr.bf16.mxu0 0
  %380 = vmatpush1.bf16.msra.mxu0 0
  %381 = vmatprep.subr.bf16.mxu0 0
  %382 = vmatpush1.bf16.msra.mxu0 0
  %383 = vmatprep.subr.bf16.mxu0 0
  %384 = vmatpush1.bf16.msra.mxu0 0
  %385 = vmatprep.subr.bf16.mxu0 0
  %386 = vmatpush1.bf16.msra.mxu0 0
  %387 = vmatprep.subr.bf16.mxu0 0
  %388 = vmatpush1.bf16.msra.mxu0 0
  %389 = vmatprep.subr.bf16.mxu0 0
  %390 = vmatpush1.bf16.msra.mxu0 0
  %391 = vmatprep.subr.bf16.mxu0 0
  %392 = vmatpush1.bf16.msra.mxu0 0
  %393 = vmatprep.subr.bf16.mxu0 0
  %394 = vmatpush1.bf16.msra.mxu0 0
  %395 = vmatprep.subr.bf16.mxu0 0
  %396 = vmatpush1.bf16.msra.mxu0 0
  %397 = vmatprep.subr.bf16.mxu0 0
  %398 = vmatpush1.bf16.msra.mxu0 0
  %399 = vmatprep.subr.bf16.mxu0 0
  %400 = vmatpush1.bf16.msra.mxu0 0
  %401 = vmatprep.subr.bf16.mxu0 0
  %402 = vmatpush1.bf16.msra.mxu0 0
  %403 = vmatprep.subr.bf16.mxu0 0
  %404 = vmatpush1.bf16.msra.mxu0 0
  %405 = vmatprep.mubr.bf16.mxu0 0
  %406 = vmatmul.mubr.bf16.gmra.mrb[0].mxu0 %v371
  %v407 = vpop.f32.mrb[0].mxu0
  %v408 = vadd.f32 0.0, %v407
  %v409 = vpop.f32.mrb[0].mxu0
  %v410 = vpop.f32.mrb[0].mxu0
  %v411 = vpop.f32.mrb[0].mxu0
  %412 = vdwg.mxu0
  %v414 = vrot.slane %v408, 5
  %v416 = vadd.f32 %v113, %v414
  %v417 = vxor.u32 %v416, 2147483648
  %v418 = vmul.f32 %v417, 1.442695
  %v419 = vpow.pop %v418
  %v420 = vadd.f32 %v419, 1.0
  %v421 = vrcp.pop %v420
  %v422 = vmul.f32 1.0, %v421
  %v423 = vtanh.pop %v416
  %v425 = vrot.slane %v354, 7
  %v427 = vmul.f32 %v422, %v425
  %429 = vrot.lane.b32.xlu0 %v423, 64
  %v430 = vpop.permute.xlu0 %429
  %v432 = vmul.f32 %v422, %v430
  %434 = vrot.lane.b32.xlu0 %v432, 32
  %v435 = vpop.permute.xlu0 %434
  %v437 = vadd.f32 %v427, %v435
  %v438 = vtanh.pop %v437
  %440 = vrot.lane.b32.xlu0 %v438, 64
  %v441 = vpop.permute.xlu0 %440
  %v443 = vmul.f32 %v422, %v441
  %v445 = vrot.slane %v443, 3
  %v447 = vadd.f32 %v364, %v445
  %v448 = vpack.c.bf16 %v443, %v443
  %v450 = vshrl.u32 %v448, 16
  %v452 = vrot.slane %v450, 1
  %453 = vrot.lane.b32.xlu0 %v452, 32
  %v454 = vpop.permute.xlu0 %453
  %v456 = vsel %vm74, %v454, 0
  %458 = vmatprep.subr.bf16.mxu0 0
  %459 = vmatpush1.bf16.msra.mxu0 %v126
  %460 = vmatprep.subr.bf16.mxu0 0
  %461 = vmatpush1.bf16.msra.mxu0 %v127
  %462 = vmatprep.subr.bf16.mxu0 0
  %463 = vmatpush1.bf16.msra.mxu0 0
  %464 = vmatprep.subr.bf16.mxu0 0
  %465 = vmatpush1.bf16.msra.mxu0 0
  %466 = vmatprep.subr.bf16.mxu0 0
  %467 = vmatpush1.bf16.msra.mxu0 0
  %468 = vmatprep.subr.bf16.mxu0 0
  %469 = vmatpush1.bf16.msra.mxu0 0
  %470 = vmatprep.subr.bf16.mxu0 0
  %471 = vmatpush1.bf16.msra.mxu0 0
  %472 = vmatprep.subr.bf16.mxu0 0
  %473 = vmatpush1.bf16.msra.mxu0 0
  %474 = vmatprep.subr.bf16.mxu0 0
  %475 = vmatpush1.bf16.msra.mxu0 0
  %476 = vmatprep.subr.bf16.mxu0 0
  %477 = vmatpush1.bf16.msra.mxu0 0
  %478 = vmatprep.subr.bf16.mxu0 0
  %479 = vmatpush1.bf16.msra.mxu0 0
  %480 = vmatprep.subr.bf16.mxu0 0
  %481 = vmatpush1.bf16.msra.mxu0 0
  %482 = vmatprep.subr.bf16.mxu0 0
  %483 = vmatpush1.bf16.msra.mxu0 0
  %484 = vmatprep.subr.bf16.mxu0 0
  %485 = vmatpush1.bf16.msra.mxu0 0
  %486 = vmatprep.subr.bf16.mxu0 0
  %487 = vmatpush1.bf16.msra.mxu0 0
  %488 = vmatprep.subr.bf16.mxu0 0
  %489 = vmatpush1.bf16.msra.mxu0 0
  %490 = vmatprep.mubr.bf16.mxu0 0
  %491 = vmatmul.mubr.bf16.gmra.mrb[0].mxu0 %v456
  %v492 = vpop.f32.mrb[0].mxu0
  %v493 = vadd.f32 0.0, %v492
  %v494 = vpop.f32.mrb[0].mxu0
  %v495 = vpop.f32.mrb[0].mxu0
  %v496 = vpop.f32.mrb[0].mxu0
  %497 = vdwg.mxu0
  %v499 = vrot.slane %v493, 4
  %v501 = vadd.f32 %v113, %v499
  %v502 = vxor.u32 %v501, 2147483648
  %v503 = vmul.f32 %v502, 1.442695
  %v504 = vpow.pop %v503
  %v505 = vadd.f32 %v504, 1.0
  %v506 = vrcp.pop %v505
  %v507 = vmul.f32 1.0, %v506
  %v508 = vtanh.pop %v501
  %v510 = vrot.slane %v437, 7
  %v512 = vmul.f32 %v507, %v510
  %514 = vrot.lane.b32.xlu0 %v508, 64
  %v515 = vpop.permute.xlu0 %514
  %v517 = vmul.f32 %v507, %v515
  %519 = vrot.lane.b32.xlu0 %v517, 32
  %v520 = vpop.permute.xlu0 %519
  %v522 = vadd.f32 %v512, %v520
  %v523 = vtanh.pop %v522
  %525 = vrot.lane.b32.xlu0 %v523, 64
  %v526 = vpop.permute.xlu0 %525
  %v528 = vmul.f32 %v507, %v526
  %v530 = vrot.slane %v528, 4
  %v532 = vadd.f32 %v447, %v530
  %v533 = vpack.c.bf16 %v528, %v528
  %v535 = vrot.slane %v533, 2
  %536 = vrot.lane.b32.xlu0 %v535, 32
  %v537 = vpop.permute.xlu0 %536
  %v539 = vsel %vm74, %v537, 0
  %541 = vmatprep.subr.bf16.mxu0 0
  %542 = vmatpush1.bf16.msra.mxu0 %v126
  %543 = vmatprep.subr.bf16.mxu0 0
  %544 = vmatpush1.bf16.msra.mxu0 %v127
  %545 = vmatprep.subr.bf16.mxu0 0
  %546 = vmatpush1.bf16.msra.mxu0 0
  %547 = vmatprep.subr.bf16.mxu0 0
  %548 = vmatpush1.bf16.msra.mxu0 0
  %549 = vmatprep.subr.bf16.mxu0 0
  %550 = vmatpush1.bf16.msra.mxu0 0
  %551 = vmatprep.subr.bf16.mxu0 0
  %552 = vmatpush1.bf16.msra.mxu0 0
  %553 = vmatprep.subr.bf16.mxu0 0
  %554 = vmatpush1.bf16.msra.mxu0 0
  %555 = vmatprep.subr.bf16.mxu0 0
  %556 = vmatpush1.bf16.msra.mxu0 0
  %557 = vmatprep.subr.bf16.mxu0 0
  %558 = vmatpush1.bf16.msra.mxu0 0
  %559 = vmatprep.subr.bf16.mxu0 0
  %560 = vmatpush1.bf16.msra.mxu0 0
  %561 = vmatprep.subr.bf16.mxu0 0
  %562 = vmatpush1.bf16.msra.mxu0 0
  %563 = vmatprep.subr.bf16.mxu0 0
  %564 = vmatpush1.bf16.msra.mxu0 0
  %565 = vmatprep.subr.bf16.mxu0 0
  %566 = vmatpush1.bf16.msra.mxu0 0
  %567 = vmatprep.subr.bf16.mxu0 0
  %568 = vmatpush1.bf16.msra.mxu0 0
  %569 = vmatprep.subr.bf16.mxu0 0
  %570 = vmatpush1.bf16.msra.mxu0 0
  %571 = vmatprep.subr.bf16.mxu0 0
  %572 = vmatpush1.bf16.msra.mxu0 0
  %573 = vmatprep.mubr.bf16.mxu0 0
  %574 = vmatmul.mubr.bf16.gmra.mrb[0].mxu0 %v539
  %v575 = vpop.f32.mrb[0].mxu0
  %v576 = vadd.f32 0.0, %v575
  %v577 = vpop.f32.mrb[0].mxu0
  %v578 = vpop.f32.mrb[0].mxu0
  %v579 = vpop.f32.mrb[0].mxu0
  %580 = vdwg.mxu0
  %v582 = vrot.slane %v576, 3
  %v584 = vadd.f32 %v113, %v582
  %v585 = vxor.u32 %v584, 2147483648
  %v586 = vmul.f32 %v585, 1.442695
  %v587 = vpow.pop %v586
  %v588 = vadd.f32 %v587, 1.0
  %v589 = vrcp.pop %v588
  %v590 = vmul.f32 1.0, %v589
  %v591 = vtanh.pop %v584
  %v593 = vrot.slane %v522, 7
  %v595 = vmul.f32 %v590, %v593
  %597 = vrot.lane.b32.xlu0 %v591, 64
  %v598 = vpop.permute.xlu0 %597
  %v600 = vmul.f32 %v590, %v598
  %602 = vrot.lane.b32.xlu0 %v600, 32
  %v603 = vpop.permute.xlu0 %602
  %v605 = vadd.f32 %v595, %v603
  %v606 = vtanh.pop %v605
  %608 = vrot.lane.b32.xlu0 %v606, 64
  %v609 = vpop.permute.xlu0 %608
  %v611 = vmul.f32 %v590, %v609
  %v613 = vrot.slane %v611, 5
  %v615 = vadd.f32 %v532, %v613
  %v616 = vpack.c.bf16 %v611, %v611
  %v618 = vshrl.u32 %v616, 16
  %v620 = vrot.slane %v618, 2
  %621 = vrot.lane.b32.xlu0 %v620, 32
  %v622 = vpop.permute.xlu0 %621
  %v624 = vsel %vm74, %v622, 0
  %626 = vmatprep.subr.bf16.mxu0 0
  %627 = vmatpush1.bf16.msra.mxu0 %v126
  %628 = vmatprep.subr.bf16.mxu0 0
  %629 = vmatpush1.bf16.msra.mxu0 %v127
  %630 = vmatprep.subr.bf16.mxu0 0
  %631 = vmatpush1.bf16.msra.mxu0 0
  %632 = vmatprep.subr.bf16.mxu0 0
  %633 = vmatpush1.bf16.msra.mxu0 0
  %634 = vmatprep.subr.bf16.mxu0 0
  %635 = vmatpush1.bf16.msra.mxu0 0
  %636 = vmatprep.subr.bf16.mxu0 0
  %637 = vmatpush1.bf16.msra.mxu0 0
  %638 = vmatprep.subr.bf16.mxu0 0
  %639 = vmatpush1.bf16.msra.mxu0 0
  %640 = vmatprep.subr.bf16.mxu0 0
  %641 = vmatpush1.bf16.msra.mxu0 0
  %642 = vmatprep.subr.bf16.mxu0 0
  %643 = vmatpush1.bf16.msra.mxu0 0
  %644 = vmatprep.subr.bf16.mxu0 0
  %645 = vmatpush1.bf16.msra.mxu0 0
  %646 = vmatprep.subr.bf16.mxu0 0
  %647 = vmatpush1.bf16.msra.mxu0 0
  %648 = vmatprep.subr.bf16.mxu0 0
  %649 = vmatpush1.bf16.msra.mxu0 0
  %650 = vmatprep.subr.bf16.mxu0 0
  %651 = vmatpush1.bf16.msra.mxu0 0
  %652 = vmatprep.subr.bf16.mxu0 0
  %653 = vmatpush1.bf16.msra.mxu0 0
  %654 = vmatprep.subr.bf16.mxu0 0
  %655 = vmatpush1.bf16.msra.mxu0 0
  %656 = vmatprep.subr.bf16.mxu0 0
  %657 = vmatpush1.bf16.msra.mxu0 0
  %658 = vmatprep.mubr.bf16.mxu0 0
  %659 = vmatmul.mubr.bf16.gmra.mrb[0].mxu0 %v624
  %v660 = vpop.f32.mrb[0].mxu0
  %v661 = vadd.f32 0.0, %v660
  %v662 = vpop.f32.mrb[0].mxu0
  %v663 = vpop.f32.mrb[0].mxu0
  %v664 = vpop.f32.mrb[0].mxu0
  %665 = vdwg.mxu0
  %v667 = vrot.slane %v661, 2
  %v669 = vadd.f32 %v113, %v667
  %v670 = vxor.u32 %v669, 2147483648
  %v671 = vmul.f32 %v670, 1.442695
  %v672 = vpow.pop %v671
  %v673 = vadd.f32 %v672, 1.0
  %v674 = vrcp.pop %v673
  %v675 = vmul.f32 1.0, %v674
  %v676 = vtanh.pop %v669
  %v678 = vrot.slane %v605, 7
  %v680 = vmul.f32 %v675, %v678
  %682 = vrot.lane.b32.xlu0 %v676, 64
  %v683 = vpop.permute.xlu0 %682
  %v685 = vmul.f32 %v675, %v683
  %687 = vrot.lane.b32.xlu0 %v685, 32
  %v688 = vpop.permute.xlu0 %687
  %v690 = vadd.f32 %v680, %v688
  %v691 = vtanh.pop %v690
  %693 = vrot.lane.b32.xlu0 %v691, 64
  %v694 = vpop.permute.xlu0 %693
  %v696 = vmul.f32 %v675, %v694
  %v698 = vrot.slane %v696, 6
  %v700 = vadd.f32 %v615, %v698
  %v701 = vpack.c.bf16 %v696, %v696
  %v703 = vrot.slane %v701, 3
  %704 = vrot.lane.b32.xlu0 %v703, 32
  %v705 = vpop.permute.xlu0 %704
  %v707 = vsel %vm74, %v705, 0
  %709 = vmatprep.subr.bf16.mxu0 0
  %710 = vmatpush1.bf16.msra.mxu0 %v126
  %711 = vmatprep.subr.bf16.mxu0 0
  %712 = vmatpush1.bf16.msra.mxu0 %v127
  %713 = vmatprep.subr.bf16.mxu0 0
  %714 = vmatpush1.bf16.msra.mxu0 0
  %715 = vmatprep.subr.bf16.mxu0 0
  %716 = vmatpush1.bf16.msra.mxu0 0
  %717 = vmatprep.subr.bf16.mxu0 0
  %718 = vmatpush1.bf16.msra.mxu0 0
  %719 = vmatprep.subr.bf16.mxu0 0
  %720 = vmatpush1.bf16.msra.mxu0 0
  %721 = vmatprep.subr.bf16.mxu0 0
  %722 = vmatpush1.bf16.msra.mxu0 0
  %723 = vmatprep.subr.bf16.mxu0 0
  %724 = vmatpush1.bf16.msra.mxu0 0
  %725 = vmatprep.subr.bf16.mxu0 0
  %726 = vmatpush1.bf16.msra.mxu0 0
  %727 = vmatprep.subr.bf16.mxu0 0
  %728 = vmatpush1.bf16.msra.mxu0 0
  %729 = vmatprep.subr.bf16.mxu0 0
  %730 = vmatpush1.bf16.msra.mxu0 0
  %731 = vmatprep.subr.bf16.mxu0 0
  %732 = vmatpush1.bf16.msra.mxu0 0
  %733 = vmatprep.subr.bf16.mxu0 0
  %734 = vmatpush1.bf16.msra.mxu0 0
  %735 = vmatprep.subr.bf16.mxu0 0
  %736 = vmatpush1.bf16.msra.mxu0 0
  %737 = vmatprep.subr.bf16.mxu0 0
  %738 = vmatpush1.bf16.msra.mxu0 0
  %739 = vmatprep.subr.bf16.mxu0 0
  %740 = vmatpush1.bf16.msra.mxu0 0
  %741 = vmatprep.mubr.bf16.mxu0 0
  %742 = vmatmul.mubr.bf16.gmra.mrb[0].mxu0 %v707
  %v743 = vpop.f32.mrb[0].mxu0
  %v744 = vadd.f32 0.0, %v743
  %v745 = vpop.f32.mrb[0].mxu0
  %v746 = vpop.f32.mrb[0].mxu0
  %v747 = vpop.f32.mrb[0].mxu0
  %748 = vdwg.mxu0
  %v750 = vrot.slane %v744, 1
  %v752 = vadd.f32 %v113, %v750
  %v753 = vxor.u32 %v752, 2147483648
  %v754 = vmul.f32 %v753, 1.442695
  %v755 = vpow.pop %v754
  %v756 = vadd.f32 %v755, 1.0
  %v757 = vrcp.pop %v756
  %v758 = vmul.f32 1.0, %v757
  %v759 = vtanh.pop %v752
  %v761 = vrot.slane %v690, 7
  %v763 = vmul.f32 %v758, %v761
  %765 = vrot.lane.b32.xlu0 %v759, 64
  %v766 = vpop.permute.xlu0 %765
  %v768 = vmul.f32 %v758, %v766
  %770 = vrot.lane.b32.xlu0 %v768, 32
  %v771 = vpop.permute.xlu0 %770
  %v773 = vadd.f32 %v763, %v771
  %v774 = vtanh.pop %v773
  %776 = vrot.lane.b32.xlu0 %v774, 64
  %v777 = vpop.permute.xlu0 %776
  %v779 = vmul.f32 %v758, %v777
  %v781 = vrot.slane %v779, 7
  %v783 = vadd.f32 %v700, %v781
  %v784 = vld [vmem:[%s8] sm:$0xff]
  %v785 = vld [vmem:[%s8 + $0x8] sm:$0xff]
  %v786 = vld [vmem:[%s8 + $0x10] sm:$0xff]
  %v787 = vld [vmem:[%s8 + $0x18] sm:$0xff]
  %v788 = vld [vmem:[%s9] sm:$0x1]
  %790 = vrot.lane.b32.xlu0 %v783, 32
  %v791 = vpop.permute.xlu0 %790
  %v792 = vsel %vm74, %v791, 0
  %794 = vmatprep.subr.mxu0 0.0
  %795 = vmatpush1.msra.mxu0 %v784
  %796 = vmatprep.subr.mxu0 0.0
  %797 = vmatpush1.msra.mxu0 %v785
  %798 = vmatprep.subr.mxu0 0.0
  %799 = vmatpush1.msra.mxu0 %v786
  %800 = vmatprep.subr.mxu0 0.0
  %801 = vmatpush1.msra.mxu0 %v787
  %802 = vmatprep.subr.mxu0 0.0
  %803 = vmatpush1.msra.mxu0 0.0
  %804 = vmatprep.subr.mxu0 0.0
  %805 = vmatpush1.msra.mxu0 0.0
  %806 = vmatprep.subr.mxu0 0.0
  %807 = vmatpush1.msra.mxu0 0.0
  %808 = vmatprep.subr.mxu0 0.0
  %809 = vmatpush1.msra.mxu0 0.0
  %810 = vmatprep.subr.mxu0 0.0
  %811 = vmatpush1.msra.mxu0 0.0
  %812 = vmatprep.subr.mxu0 0.0
  %813 = vmatpush1.msra.mxu0 0.0
  %814 = vmatprep.subr.mxu0 0.0
  %815 = vmatpush1.msra.mxu0 0.0
  %816 = vmatprep.subr.mxu0 0.0
  %817 = vmatpush1.msra.mxu0 0.0
  %818 = vmatprep.subr.mxu0 0.0
  %819 = vmatpush1.msra.mxu0 0.0
  %820 = vmatprep.subr.mxu0 0.0
  %821 = vmatpush1.msra.mxu0 0.0
  %822 = vmatprep.subr.mxu0 0.0
  %823 = vmatpush1.msra.mxu0 0.0
  %824 = vmatprep.subr.mxu0 0.0
  %825 = vmatpush1.msra.mxu0 0.0
  %826 = vmatprep.subr.mxu0 0.0
  %827 = vmatpush1.msra.mxu0 0.0
  %828 = vmatprep.subr.mxu0 0.0
  %829 = vmatpush1.msra.mxu0 0.0
  %830 = vmatprep.subr.mxu0 0.0
  %831 = vmatpush1.msra.mxu0 0.0
  %832 = vmatprep.subr.mxu0 0.0
  %833 = vmatpush1.msra.mxu0 0.0
  %834 = vmatprep.subr.mxu0 0.0
  %835 = vmatpush1.msra.mxu0 0.0
  %836 = vmatprep.subr.mxu0 0.0
  %837 = vmatpush1.msra.mxu0 0.0
  %838 = vmatprep.subr.mxu0 0.0
  %839 = vmatpush1.msra.mxu0 0.0
  %840 = vmatprep.subr.mxu0 0.0
  %841 = vmatpush1.msra.mxu0 0.0
  %842 = vmatprep.subr.mxu0 0.0
  %843 = vmatpush1.msra.mxu0 0.0
  %844 = vmatprep.subr.mxu0 0.0
  %845 = vmatpush1.msra.mxu0 0.0
  %846 = vmatprep.subr.mxu0 0.0
  %847 = vmatpush1.msra.mxu0 0.0
  %848 = vmatprep.subr.mxu0 0.0
  %849 = vmatpush1.msra.mxu0 0.0
  %850 = vmatprep.subr.mxu0 0.0
  %851 = vmatpush1.msra.mxu0 0.0
  %852 = vmatprep.subr.mxu0 0.0
  %853 = vmatpush1.msra.mxu0 0.0
  %854 = vmatprep.subr.mxu0 0.0
  %855 = vmatpush1.msra.mxu0 0.0
  %856 = vmatprep.subr.mxu0 0.0
  %857 = vmatpush1.msra.mxu0 0.0
  %858 = vmatprep.mubr.f32.mxu0 0.0
  %859 = vmatmul.mubr.f32.gmra.mrb[0].mxu0 %v792
  %v860 = vpop.f32.mrb[0].mxu0
  %v861 = vadd.f32 %v788, %v860
  %v862 = vpop.f32.mrb[0].mxu0
  %863 = vdwg.mxu0
  %v864 = vld [vmem:[%s1] sm:$0xf]
  %v865 = vld [vmem:[%s5] sm:$0xf]
  %v866 = vld [vmem:[%s5 + $0x4] sm:$0xf]
  %v867 = vld [vmem:[%s5 + $0x8] sm:$0xf]
  %v868 = vld [vmem:[%s5 + $0xc] sm:$0xf]
  %v869 = vld [vmem:[%s6] sm:$0x1]
  %v871 = vlaneseq
  %v872 = vshrl.u32 %v871, 7
  %v873 = vsub.s32 0, %v872
  %v874 = vrot.slane %v869, %v873
  %v880 = vunpack.c.l.b16 %v865
  %v881 = vunpack.c.l.b16 %v866
  %v882 = vunpack.c.l.b16 %v867
  %v883 = vunpack.c.l.b16 %v868
  %v884 = vpack.c.b16 %v881, %v880
  %v885 = vpack.c.b16 %v883, %v882
  %v889 = vsel %vm74, %v864, 0
  %891 = vmatprep.subr.bf16.mxu0 0
  %892 = vmatpush1.bf16.msra.mxu0 %v884
  %893 = vmatprep.subr.bf16.mxu0 0
  %894 = vmatpush1.bf16.msra.mxu0 %v885
  %895 = vmatprep.subr.bf16.mxu0 0
  %896 = vmatpush1.bf16.msra.mxu0 0
  %897 = vmatprep.subr.bf16.mxu0 0
  %898 = vmatpush1.bf16.msra.mxu0 0
  %899 = vmatprep.subr.bf16.mxu0 0
  %900 = vmatpush1.bf16.msra.mxu0 0
  %901 = vmatprep.subr.bf16.mxu0 0
  %902 = vmatpush1.bf16.msra.mxu0 0
  %903 = vmatprep.subr.bf16.mxu0 0
  %904 = vmatpush1.bf16.msra.mxu0 0
  %905 = vmatprep.subr.bf16.mxu0 0
  %906 = vmatpush1.bf16.msra.mxu0 0
  %907 = vmatprep.subr.bf16.mxu0 0
  %908 = vmatpush1.bf16.msra.mxu0 0
  %909 = vmatprep.subr.bf16.mxu0 0
  %910 = vmatpush1.bf16.msra.mxu0 0
  %911 = vmatprep.subr.bf16.mxu0 0
  %912 = vmatpush1.bf16.msra.mxu0 0
  %913 = vmatprep.subr.bf16.mxu0 0
  %914 = vmatpush1.bf16.msra.mxu0 0
  %915 = vmatprep.subr.bf16.mxu0 0
  %916 = vmatpush1.bf16.msra.mxu0 0
  %917 = vmatprep.subr.bf16.mxu0 0
  %918 = vmatpush1.bf16.msra.mxu0 0
  %919 = vmatprep.subr.bf16.mxu0 0
  %920 = vmatpush1.bf16.msra.mxu0 0
  %921 = vmatprep.subr.bf16.mxu0 0
  %922 = vmatpush1.bf16.msra.mxu0 0
  %923 = vmatprep.mubr.bf16.mxu0 0
  %924 = vmatmul.mubr.bf16.gmra.mrb[0].mxu0 %v889
  %v925 = vpop.f32.mrb[0].mxu0
  %v926 = vadd.f32 %v874, %v925
  %v927 = vpop.f32.mrb[0].mxu0
  %v928 = vpop.f32.mrb[0].mxu0
  %v929 = vpop.f32.mrb[0].mxu0
  %930 = vdwg.mxu0
  %v931 = vlaneseq
  %v932 = vshrl.u32 %v931, 7
  %v933 = vsub.s32 0, %v932
  %v934 = vrot.slane %v861, %v933
  %v935 = vadd.f32 %v926, %v934
  %v936 = vpack.c.bf16 %v779, %v779
  %v938 = vshrl.u32 %v936, 16
  %v940 = vrot.slane %v938, 3
  %941 = vrot.lane.b32.xlu0 %v940, 32
  %v942 = vpop.permute.xlu0 %941
  %v947 = vunpack.c.l.b16 %v46
  %v948 = vunpack.c.l.b16 %v47
  %v949 = vunpack.c.l.b16 %v48
  %v950 = vunpack.c.l.b16 %v49
  %v951 = vpack.c.b16 %v948, %v947
  %v952 = vpack.c.b16 %v950, %v949
  %v956 = vsel %vm74, %v942, 0
  %958 = vmatprep.subr.bf16.mxu0 0
  %959 = vmatpush1.bf16.msra.mxu0 %v951
  %960 = vmatprep.subr.bf16.mxu0 0
  %961 = vmatpush1.bf16.msra.mxu0 %v952
  %962 = vmatprep.subr.bf16.mxu0 0
  %963 = vmatpush1.bf16.msra.mxu0 0
  %964 = vmatprep.subr.bf16.mxu0 0
  %965 = vmatpush1.bf16.msra.mxu0 0
  %966 = vmatprep.subr.bf16.mxu0 0
  %967 = vmatpush1.bf16.msra.mxu0 0
  %968 = vmatprep.subr.bf16.mxu0 0
  %969 = vmatpush1.bf16.msra.mxu0 0
  %970 = vmatprep.subr.bf16.mxu0 0
  %971 = vmatpush1.bf16.msra.mxu0 0
  %972 = vmatprep.subr.bf16.mxu0 0
  %973 = vmatpush1.bf16.msra.mxu0 0
  %974 = vmatprep.subr.bf16.mxu0 0
  %975 = vmatpush1.bf16.msra.mxu0 0
  %976 = vmatprep.subr.bf16.mxu0 0
  %977 = vmatpush1.bf16.msra.mxu0 0
  %978 = vmatprep.subr.bf16.mxu0 0
  %979 = vmatpush1.bf16.msra.mxu0 0
  %980 = vmatprep.subr.bf16.mxu0 0
  %981 = vmatpush1.bf16.msra.mxu0 0
  %982 = vmatprep.subr.bf16.mxu0 0
  %983 = vmatpush1.bf16.msra.mxu0 0
  %984 = vmatprep.subr.bf16.mxu0 0
  %985 = vmatpush1.bf16.msra.mxu0 0
  %986 = vmatprep.subr.bf16.mxu0 0
  %987 = vmatpush1.bf16.msra.mxu0 0
  %988 = vmatprep.subr.bf16.mxu0 0
  %989 = vmatpush1.bf16.msra.mxu0 0
  %990 = vmatprep.mubr.bf16.mxu0 0
  %991 = vmatmul.mubr.bf16.gmra.mrb[0].mxu0 %v956
  %v992 = vpop.f32.mrb[0].mxu0
  %v993 = vadd.f32 0.0, %v992
  %v994 = vpop.f32.mrb[0].mxu0
  %v995 = vpop.f32.mrb[0].mxu0
  %v996 = vpop.f32.mrb[0].mxu0
  %997 = vdwg.mxu0
  %v998 = vadd.f32 %v935, %v993
  %v999 = vxor.u32 %v998, 2147483648
  %v1000 = vmul.f32 %v999, 1.442695
  %v1001 = vpow.pop %v1000
  %v1002 = vadd.f32 %v1001, 1.0
  %v1003 = vrcp.pop %v1002
  %v1004 = vmul.f32 1.0, %v1003
  %v1005 = vtanh.pop %v998
  %v1007 = vrot.slane %v773, 7
  %v1009 = vmul.f32 %v1004, %v1007
  %1011 = vrot.lane.b32.xlu0 %v1005, 64
  %v1012 = vpop.permute.xlu0 %1011
  %v1014 = vmul.f32 %v1004, %v1012
  %1016 = vrot.lane.b32.xlu0 %v1014, 32
  %v1017 = vpop.permute.xlu0 %1016
  %v1019 = vadd.f32 %v1009, %v1017
  %v1020 = vtanh.pop %v1019
  %1022 = vrot.lane.b32.xlu0 %v1020, 64
  %v1023 = vpop.permute.xlu0 %1022
  %v1025 = vmul.f32 %v1004, %v1023
  %1027 = vrot.lane.b32.xlu0 %v1025, 32
  %v1028 = vpop.permute.xlu0 %1027
  %vm1030 = vcmask 253952
  %1031 = vst.msk [vmem:[#allocation2] sm:$0x1] %vm1030, %v1028
  %v1032 = vpack.c.bf16 %v1025, %v1025
  %1034 = vrot.lane.b32.xlu0 %v1032, 32
  %v1035 = vpop.permute.xlu0 %1034
  %v1037 = vsel %vm74, %v1035, 0
  %1039 = vmatprep.subr.bf16.mxu0 0
  %1040 = vmatpush1.bf16.msra.mxu0 %v951
  %1041 = vmatprep.subr.bf16.mxu0 0
  %1042 = vmatpush1.bf16.msra.mxu0 %v952
  %1043 = vmatprep.subr.bf16.mxu0 0
  %1044 = vmatpush1.bf16.msra.mxu0 0
  %1045 = vmatprep.subr.bf16.mxu0 0
  %1046 = vmatpush1.bf16.msra.mxu0 0
  %1047 = vmatprep.subr.bf16.mxu0 0
  %1048 = vmatpush1.bf16.msra.mxu0 0
  %1049 = vmatprep.subr.bf16.mxu0 0
  %1050 = vmatpush1.bf16.msra.mxu0 0
  %1051 = vmatprep.subr.bf16.mxu0 0
  %1052 = vmatpush1.bf16.msra.mxu0 0
  %1053 = vmatprep.subr.bf16.mxu0 0
  %1054 = vmatpush1.bf16.msra.mxu0 0
  %1055 = vmatprep.subr.bf16.mxu0 0
  %1056 = vmatpush1.bf16.msra.mxu0 0
  %1057 = vmatprep.subr.bf16.mxu0 0
  %1058 = vmatpush1.bf16.msra.mxu0 0
  %1059 = vmatprep.subr.bf16.mxu0 0
  %1060 = vmatpush1.bf16.msra.mxu0 0
  %1061 = vmatprep.subr.bf16.mxu0 0
  %1062 = vmatpush1.bf16.msra.mxu0 0
  %1063 = vmatprep.subr.bf16.mxu0 0
  %1064 = vmatpush1.bf16.msra.mxu0 0
  %1065 = vmatprep.subr.bf16.mxu0 0
  %1066 = vmatpush1.bf16.msra.mxu0 0
  %1067 = vmatprep.subr.bf16.mxu0 0
  %1068 = vmatpush1.bf16.msra.mxu0 0
  %1069 = vmatprep.subr.bf16.mxu0 0
  %1070 = vmatpush1.bf16.msra.mxu0 0
  %1071 = vmatprep.mubr.bf16.mxu0 0
  %1072 = vmatmul.mubr.bf16.gmra.mrb[0].mxu0 %v1037
  %v1073 = vpop.f32.mrb[0].mxu0
  %v1074 = vadd.f32 0.0, %v1073
  %v1075 = vpop.f32.mrb[0].mxu0
  %v1076 = vpop.f32.mrb[0].mxu0
  %v1077 = vpop.f32.mrb[0].mxu0
  %1078 = vdwg.mxu0
  %v1080 = vrot.slane %v1074, 7
  %v1082 = vadd.f32 %v935, %v1080
  %v1083 = vxor.u32 %v1082, 2147483648
  %v1084 = vmul.f32 %v1083, 1.442695
  %v1085 = vpow.pop %v1084
  %v1086 = vadd.f32 %v1085, 1.0
  %v1087 = vrcp.pop %v1086
  %v1088 = vmul.f32 1.0, %v1087
  %v1089 = vtanh.pop %v1082
  %v1091 = vrot.slane %v1019, 7
  %v1093 = vmul.f32 %v1088, %v1091
  %1095 = vrot.lane.b32.xlu0 %v1089, 64
  %v1096 = vpop.permute.xlu0 %1095
  %v1098 = vmul.f32 %v1088, %v1096
  %1100 = vrot.lane.b32.xlu0 %v1098, 32
  %v1101 = vpop.permute.xlu0 %1100
  %v1103 = vadd.f32 %v1093, %v1101
  %v1104 = vtanh.pop %v1103
  %1106 = vrot.lane.b32.xlu0 %v1104, 64
  %v1107 = vpop.permute.xlu0 %1106
  %v1109 = vmul.f32 %v1088, %v1107
  %1111 = vrot.lane.b32.xlu0 %v1109, 32
  %v1112 = vpop.permute.xlu0 %1111
  %vm1114 = vcmask 254977
  %1115 = vst.msk [vmem:[#allocation2] sm:$0x2] %vm1114, %v1112
  %v1116 = vpack.c.bf16 %v1109, %v1109
  %v1118 = vshrl.u32 %v1116, 16
  %1120 = vrot.lane.b32.xlu0 %v1118, 32
  %v1121 = vpop.permute.xlu0 %1120
  %v1123 = vsel %vm74, %v1121, 0
  %1125 = vmatprep.subr.bf16.mxu0 0
  %1126 = vmatpush1.bf16.msra.mxu0 %v951
  %1127 = vmatprep.subr.bf16.mxu0 0
  %1128 = vmatpush1.bf16.msra.mxu0 %v952
  %1129 = vmatprep.subr.bf16.mxu0 0
  %1130 = vmatpush1.bf16.msra.mxu0 0
  %1131 = vmatprep.subr.bf16.mxu0 0
  %1132 = vmatpush1.bf16.msra.mxu0 0
  %1133 = vmatprep.subr.bf16.mxu0 0
  %1134 = vmatpush1.bf16.msra.mxu0 0
  %1135 = vmatprep.subr.bf16.mxu0 0
  %1136 = vmatpush1.bf16.msra.mxu0 0
  %1137 = vmatprep.subr.bf16.mxu0 0
  %1138 = vmatpush1.bf16.msra.mxu0 0
  %1139 = vmatprep.subr.bf16.mxu0 0
  %1140 = vmatpush1.bf16.msra.mxu0 0
  %1141 = vmatprep.subr.bf16.mxu0 0
  %1142 = vmatpush1.bf16.msra.mxu0 0
  %1143 = vmatprep.subr.bf16.mxu0 0
  %1144 = vmatpush1.bf16.msra.mxu0 0
  %1145 = vmatprep.subr.bf16.mxu0 0
  %1146 = vmatpush1.bf16.msra.mxu0 0
  %1147 = vmatprep.subr.bf16.mxu0 0
  %1148 = vmatpush1.bf16.msra.mxu0 0
  %1149 = vmatprep.subr.bf16.mxu0 0
  %1150 = vmatpush1.bf16.msra.mxu0 0
  %1151 = vmatprep.subr.bf16.mxu0 0
  %1152 = vmatpush1.bf16.msra.mxu0 0
  %1153 = vmatprep.subr.bf16.mxu0 0
  %1154 = vmatpush1.bf16.msra.mxu0 0
  %1155 = vmatprep.subr.bf16.mxu0 0
  %1156 = vmatpush1.bf16.msra.mxu0 0
  %1157 = vmatprep.mubr.bf16.mxu0 0
  %1158 = vmatmul.mubr.bf16.gmra.mrb[0].mxu0 %v1123
  %v1159 = vpop.f32.mrb[0].mxu0
  %v1160 = vadd.f32 0.0, %v1159
  %v1161 = vpop.f32.mrb[0].mxu0
  %v1162 = vpop.f32.mrb[0].mxu0
  %v1163 = vpop.f32.mrb[0].mxu0
  %1164 = vdwg.mxu0
  %v1166 = vrot.slane %v1160, 6
  %v1168 = vadd.f32 %v935, %v1166
  %v1169 = vxor.u32 %v1168, 2147483648
  %v1170 = vmul.f32 %v1169, 1.442695
  %v1171 = vpow.pop %v1170
  %v1172 = vadd.f32 %v1171, 1.0
  %v1173 = vrcp.pop %v1172
  %v1174 = vmul.f32 1.0, %v1173
  %v1175 = vtanh.pop %v1168
  %v1177 = vrot.slane %v1103, 7
  %v1179 = vmul.f32 %v1174, %v1177
  %1181 = vrot.lane.b32.xlu0 %v1175, 64
  %v1182 = vpop.permute.xlu0 %1181
  %v1184 = vmul.f32 %v1174, %v1182
  %1186 = vrot.lane.b32.xlu0 %v1184, 32
  %v1187 = vpop.permute.xlu0 %1186
  %v1189 = vadd.f32 %v1179, %v1187
  %v1190 = vtanh.pop %v1189
  %1192 = vrot.lane.b32.xlu0 %v1190, 64
  %v1193 = vpop.permute.xlu0 %1192
  %v1195 = vmul.f32 %v1174, %v1193
  %1197 = vrot.lane.b32.xlu0 %v1195, 32
  %v1198 = vpop.permute.xlu0 %1197
  %vm1200 = vcmask 256002
  %1201 = vst.msk [vmem:[#allocation2] sm:$0x4] %vm1200, %v1198
  %v1202 = vpack.c.bf16 %v1195, %v1195
  %v1204 = vrot.slane %v1202, 1
  %1205 = vrot.lane.b32.xlu0 %v1204, 32
  %v1206 = vpop.permute.xlu0 %1205
  %v1208 = vsel %vm74, %v1206, 0
  %1210 = vmatprep.subr.bf16.mxu0 0
  %1211 = vmatpush1.bf16.msra.mxu0 %v951
  %1212 = vmatprep.subr.bf16.mxu0 0
  %1213 = vmatpush1.bf16.msra.mxu0 %v952
  %1214 = vmatprep.subr.bf16.mxu0 0
  %1215 = vmatpush1.bf16.msra.mxu0 0
  %1216 = vmatprep.subr.bf16.mxu0 0
  %1217 = vmatpush1.bf16.msra.mxu0 0
  %1218 = vmatprep.subr.bf16.mxu0 0
  %1219 = vmatpush1.bf16.msra.mxu0 0
  %1220 = vmatprep.subr.bf16.mxu0 0
  %1221 = vmatpush1.bf16.msra.mxu0 0
  %1222 = vmatprep.subr.bf16.mxu0 0
  %1223 = vmatpush1.bf16.msra.mxu0 0
  %1224 = vmatprep.subr.bf16.mxu0 0
  %1225 = vmatpush1.bf16.msra.mxu0 0
  %1226 = vmatprep.subr.bf16.mxu0 0
  %1227 = vmatpush1.bf16.msra.mxu0 0
  %1228 = vmatprep.subr.bf16.mxu0 0
  %1229 = vmatpush1.bf16.msra.mxu0 0
  %1230 = vmatprep.subr.bf16.mxu0 0
  %1231 = vmatpush1.bf16.msra.mxu0 0
  %1232 = vmatprep.subr.bf16.mxu0 0
  %1233 = vmatpush1.bf16.msra.mxu0 0
  %1234 = vmatprep.subr.bf16.mxu0 0
  %1235 = vmatpush1.bf16.msra.mxu0 0
  %1236 = vmatprep.subr.bf16.mxu0 0
  %1237 = vmatpush1.bf16.msra.mxu0 0
  %1238 = vmatprep.subr.bf16.mxu0 0
  %1239 = vmatpush1.bf16.msra.mxu0 0
  %1240 = vmatprep.subr.bf16.mxu0 0
  %1241 = vmatpush1.bf16.msra.mxu0 0
  %1242 = vmatprep.mubr.bf16.mxu0 0
  %1243 = vmatmul.mubr.bf16.gmra.mrb[0].mxu0 %v1208
  %v1244 = vpop.f32.mrb[0].mxu0
  %v1245 = vadd.f32 0.0, %v1244
  %v1246 = vpop.f32.mrb[0].mxu0
  %v1247 = vpop.f32.mrb[0].mxu0
  %v1248 = vpop.f32.mrb[0].mxu0
  %1249 = vdwg.mxu0
  %v1251 = vrot.slane %v1245, 5
  %v1253 = vadd.f32 %v935, %v1251
  %v1254 = vxor.u32 %v1253, 2147483648
  %v1255 = vmul.f32 %v1254, 1.442695
  %v1256 = vpow.pop %v1255
  %v1257 = vadd.f32 %v1256, 1.0
  %v1258 = vrcp.pop %v1257
  %v1259 = vmul.f32 1.0, %v1258
  %v1260 = vtanh.pop %v1253
  %v1262 = vrot.slane %v1189, 7
  %v1264 = vmul.f32 %v1259, %v1262
  %1266 = vrot.lane.b32.xlu0 %v1260, 64
  %v1267 = vpop.permute.xlu0 %1266
  %v1269 = vmul.f32 %v1259, %v1267
  %1271 = vrot.lane.b32.xlu0 %v1269, 32
  %v1272 = vpop.permute.xlu0 %1271
  %v1274 = vadd.f32 %v1264, %v1272
  %v1275 = vtanh.pop %v1274
  %1277 = vrot.lane.b32.xlu0 %v1275, 64
  %v1278 = vpop.permute.xlu0 %1277
  %v1280 = vmul.f32 %v1259, %v1278
  %1282 = vrot.lane.b32.xlu0 %v1280, 32
  %v1283 = vpop.permute.xlu0 %1282
  %vm1285 = vcmask 257027
  %1286 = vst.msk [vmem:[#allocation2] sm:$0x8] %vm1285, %v1283
  %v1287 = vpack.c.bf16 %v1280, %v1280
  %v1289 = vshrl.u32 %v1287, 16
  %v1291 = vrot.slane %v1289, 1
  %1292 = vrot.lane.b32.xlu0 %v1291, 32
  %v1293 = vpop.permute.xlu0 %1292
  %v1295 = vsel %vm74, %v1293, 0
  %1297 = vmatprep.subr.bf16.mxu0 0
  %1298 = vmatpush1.bf16.msra.mxu0 %v951
  %1299 = vmatprep.subr.bf16.mxu0 0
  %1300 = vmatpush1.bf16.msra.mxu0 %v952
  %1301 = vmatprep.subr.bf16.mxu0 0
  %1302 = vmatpush1.bf16.msra.mxu0 0
  %1303 = vmatprep.subr.bf16.mxu0 0
  %1304 = vmatpush1.bf16.msra.mxu0 0
  %1305 = vmatprep.subr.bf16.mxu0 0
  %1306 = vmatpush1.bf16.msra.mxu0 0
  %1307 = vmatprep.subr.bf16.mxu0 0
  %1308 = vmatpush1.bf16.msra.mxu0 0
  %1309 = vmatprep.subr.bf16.mxu0 0
  %1310 = vmatpush1.bf16.msra.mxu0 0
  %1311 = vmatprep.subr.bf16.mxu0 0
  %1312 = vmatpush1.bf16.msra.mxu0 0
  %1313 = vmatprep.subr.bf16.mxu0 0
  %1314 = vmatpush1.bf16.msra.mxu0 0
  %1315 = vmatprep.subr.bf16.mxu0 0
  %1316 = vmatpush1.bf16.msra.mxu0 0
  %1317 = vmatprep.subr.bf16.mxu0 0
  %1318 = vmatpush1.bf16.msra.mxu0 0
  %1319 = vmatprep.subr.bf16.mxu0 0
  %1320 = vmatpush1.bf16.msra.mxu0 0
  %1321 = vmatprep.subr.bf16.mxu0 0
  %1322 = vmatpush1.bf16.msra.mxu0 0
  %1323 = vmatprep.subr.bf16.mxu0 0
  %1324 = vmatpush1.bf16.msra.mxu0 0
  %1325 = vmatprep.subr.bf16.mxu0 0
  %1326 = vmatpush1.bf16.msra.mxu0 0
  %1327 = vmatprep.subr.bf16.mxu0 0
  %1328 = vmatpush1.bf16.msra.mxu0 0
  %1329 = vmatprep.mubr.bf16.mxu0 0
  %1330 = vmatmul.mubr.bf16.gmra.mrb[0].mxu0 %v1295
  %v1331 = vpop.f32.mrb[0].mxu0
  %v1332 = vadd.f32 0.0, %v1331
  %v1333 = vpop.f32.mrb[0].mxu0
  %v1334 = vpop.f32.mrb[0].mxu0
  %v1335 = vpop.f32.mrb[0].mxu0
  %1336 = vdwg.mxu0
  %v1338 = vrot.slane %v1332, 4
  %v1340 = vadd.f32 %v935, %v1338
  %v1341 = vxor.u32 %v1340, 2147483648
  %v1342 = vmul.f32 %v1341, 1.442695
  %v1343 = vpow.pop %v1342
  %v1344 = vadd.f32 %v1343, 1.0
  %v1345 = vrcp.pop %v1344
  %v1346 = vmul.f32 1.0, %v1345
  %v1347 = vtanh.pop %v1340
  %v1349 = vrot.slane %v1274, 7
  %v1351 = vmul.f32 %v1346, %v1349
  %1353 = vrot.lane.b32.xlu0 %v1347, 64
  %v1354 = vpop.permute.xlu0 %1353
  %v1356 = vmul.f32 %v1346, %v1354
  %1358 = vrot.lane.b32.xlu0 %v1356, 32
  %v1359 = vpop.permute.xlu0 %1358
  %v1361 = vadd.f32 %v1351, %v1359
  %v1362 = vtanh.pop %v1361
  %1364 = vrot.lane.b32.xlu0 %v1362, 64
  %v1365 = vpop.permute.xlu0 %1364
  %v1367 = vmul.f32 %v1346, %v1365
  %1369 = vrot.lane.b32.xlu0 %v1367, 32
  %v1370 = vpop.permute.xlu0 %1369
  %vm1372 = vcmask 258052
  %1373 = vst.msk [vmem:[#allocation2] sm:$0x10] %vm1372, %v1370
  %v1374 = vpack.c.bf16 %v1367, %v1367
  %v1376 = vrot.slane %v1374, 2
  %1377 = vrot.lane.b32.xlu0 %v1376, 32
  %v1378 = vpop.permute.xlu0 %1377
  %v1380 = vsel %vm74, %v1378, 0
  %1382 = vmatprep.subr.bf16.mxu0 0
  %1383 = vmatpush1.bf16.msra.mxu0 %v951
  %1384 = vmatprep.subr.bf16.mxu0 0
  %1385 = vmatpush1.bf16.msra.mxu0 %v952
  %1386 = vmatprep.subr.bf16.mxu0 0
  %1387 = vmatpush1.bf16.msra.mxu0 0
  %1388 = vmatprep.subr.bf16.mxu0 0
  %1389 = vmatpush1.bf16.msra.mxu0 0
  %1390 = vmatprep.subr.bf16.mxu0 0
  %1391 = vmatpush1.bf16.msra.mxu0 0
  %1392 = vmatprep.subr.bf16.mxu0 0
  %1393 = vmatpush1.bf16.msra.mxu0 0
  %1394 = vmatprep.subr.bf16.mxu0 0
  %1395 = vmatpush1.bf16.msra.mxu0 0
  %1396 = vmatprep.subr.bf16.mxu0 0
  %1397 = vmatpush1.bf16.msra.mxu0 0
  %1398 = vmatprep.subr.bf16.mxu0 0
  %1399 = vmatpush1.bf16.msra.mxu0 0
  %1400 = vmatprep.subr.bf16.mxu0 0
  %1401 = vmatpush1.bf16.msra.mxu0 0
  %1402 = vmatprep.subr.bf16.mxu0 0
  %1403 = vmatpush1.bf16.msra.mxu0 0
  %1404 = vmatprep.subr.bf16.mxu0 0
  %1405 = vmatpush1.bf16.msra.mxu0 0
  %1406 = vmatprep.subr.bf16.mxu0 0
  %1407 = vmatpush1.bf16.msra.mxu0 0
  %1408 = vmatprep.subr.bf16.mxu0 0
  %1409 = vmatpush1.bf16.msra.mxu0 0
  %1410 = vmatprep.subr.bf16.mxu0 0
  %1411 = vmatpush1.bf16.msra.mxu0 0
  %1412 = vmatprep.subr.bf16.mxu0 0
  %1413 = vmatpush1.bf16.msra.mxu0 0
  %1414 = vmatprep.mubr.bf16.mxu0 0
  %1415 = vmatmul.mubr.bf16.gmra.mrb[0].mxu0 %v1380
  %v1416 = vpop.f32.mrb[0].mxu0
  %v1417 = vadd.f32 0.0, %v1416
  %v1418 = vpop.f32.mrb[0].mxu0
  %v1419 = vpop.f32.mrb[0].mxu0
  %v1420 = vpop.f32.mrb[0].mxu0
  %1421 = vdwg.mxu0
  %v1423 = vrot.slane %v1417, 3
  %v1425 = vadd.f32 %v935, %v1423
  %v1426 = vxor.u32 %v1425, 2147483648
  %v1427 = vmul.f32 %v1426, 1.442695
  %v1428 = vpow.pop %v1427
  %v1429 = vadd.f32 %v1428, 1.0
  %v1430 = vrcp.pop %v1429
  %v1431 = vmul.f32 1.0, %v1430
  %v1432 = vtanh.pop %v1425
  %v1434 = vrot.slane %v1361, 7
  %v1436 = vmul.f32 %v1431, %v1434
  %1438 = vrot.lane.b32.xlu0 %v1432, 64
  %v1439 = vpop.permute.xlu0 %1438
  %v1441 = vmul.f32 %v1431, %v1439
  %1443 = vrot.lane.b32.xlu0 %v1441, 32
  %v1444 = vpop.permute.xlu0 %1443
  %v1446 = vadd.f32 %v1436, %v1444
  %v1447 = vtanh.pop %v1446
  %1449 = vrot.lane.b32.xlu0 %v1447, 64
  %v1450 = vpop.permute.xlu0 %1449
  %v1452 = vmul.f32 %v1431, %v1450
  %1454 = vrot.lane.b32.xlu0 %v1452, 32
  %v1455 = vpop.permute.xlu0 %1454
  %vm1457 = vcmask 259077
  %1458 = vst.msk [vmem:[#allocation2] sm:$0x20] %vm1457, %v1455
  %v1459 = vpack.c.bf16 %v1452, %v1452
  %v1461 = vshrl.u32 %v1459, 16
  %v1463 = vrot.slane %v1461, 2
  %1464 = vrot.lane.b32.xlu0 %v1463, 32
  %v1465 = vpop.permute.xlu0 %1464
  %v1467 = vsel %vm74, %v1465, 0
  %1469 = vmatprep.subr.bf16.mxu0 0
  %1470 = vmatpush1.bf16.msra.mxu0 %v951
  %1471 = vmatprep.subr.bf16.mxu0 0
  %1472 = vmatpush1.bf16.msra.mxu0 %v952
  %1473 = vmatprep.subr.bf16.mxu0 0
  %1474 = vmatpush1.bf16.msra.mxu0 0
  %1475 = vmatprep.subr.bf16.mxu0 0
  %1476 = vmatpush1.bf16.msra.mxu0 0
  %1477 = vmatprep.subr.bf16.mxu0 0
  %1478 = vmatpush1.bf16.msra.mxu0 0
  %1479 = vmatprep.subr.bf16.mxu0 0
  %1480 = vmatpush1.bf16.msra.mxu0 0
  %1481 = vmatprep.subr.bf16.mxu0 0
  %1482 = vmatpush1.bf16.msra.mxu0 0
  %1483 = vmatprep.subr.bf16.mxu0 0
  %1484 = vmatpush1.bf16.msra.mxu0 0
  %1485 = vmatprep.subr.bf16.mxu0 0
  %1486 = vmatpush1.bf16.msra.mxu0 0
  %1487 = vmatprep.subr.bf16.mxu0 0
  %1488 = vmatpush1.bf16.msra.mxu0 0
  %1489 = vmatprep.subr.bf16.mxu0 0
  %1490 = vmatpush1.bf16.msra.mxu0 0
  %1491 = vmatprep.subr.bf16.mxu0 0
  %1492 = vmatpush1.bf16.msra.mxu0 0
  %1493 = vmatprep.subr.bf16.mxu0 0
  %1494 = vmatpush1.bf16.msra.mxu0 0
  %1495 = vmatprep.subr.bf16.mxu0 0
  %1496 = vmatpush1.bf16.msra.mxu0 0
  %1497 = vmatprep.subr.bf16.mxu0 0
  %1498 = vmatpush1.bf16.msra.mxu0 0
  %1499 = vmatprep.subr.bf16.mxu0 0
  %1500 = vmatpush1.bf16.msra.mxu0 0
  %1501 = vmatprep.mubr.bf16.mxu0 0
  %1502 = vmatmul.mubr.bf16.gmra.mrb[0].mxu0 %v1467
  %v1503 = vpop.f32.mrb[0].mxu0
  %v1504 = vadd.f32 0.0, %v1503
  %v1505 = vpop.f32.mrb[0].mxu0
  %v1506 = vpop.f32.mrb[0].mxu0
  %v1507 = vpop.f32.mrb[0].mxu0
  %1508 = vdwg.mxu0
  %v1510 = vrot.slane %v1504, 2
  %v1512 = vadd.f32 %v935, %v1510
  %v1513 = vxor.u32 %v1512, 2147483648
  %v1514 = vmul.f32 %v1513, 1.442695
  %v1515 = vpow.pop %v1514
  %v1516 = vadd.f32 %v1515, 1.0
  %v1517 = vrcp.pop %v1516
  %v1518 = vmul.f32 1.0, %v1517
  %v1519 = vtanh.pop %v1512
  %v1521 = vrot.slane %v1446, 7
  %v1523 = vmul.f32 %v1518, %v1521
  %1525 = vrot.lane.b32.xlu0 %v1519, 64
  %v1526 = vpop.permute.xlu0 %1525
  %v1528 = vmul.f32 %v1518, %v1526
  %1530 = vrot.lane.b32.xlu0 %v1528, 32
  %v1531 = vpop.permute.xlu0 %1530
  %v1533 = vadd.f32 %v1523, %v1531
  %v1534 = vtanh.pop %v1533
  %1536 = vrot.lane.b32.xlu0 %v1534, 64
  %v1537 = vpop.permute.xlu0 %1536
  %v1539 = vmul.f32 %v1518, %v1537
  %1541 = vrot.lane.b32.xlu0 %v1539, 32
  %v1542 = vpop.permute.xlu0 %1541
  %vm1544 = vcmask 260102
  %1545 = vst.msk [vmem:[#allocation2] sm:$0x40] %vm1544, %v1542
  %v1546 = vpack.c.bf16 %v1539, %v1539
  %v1548 = vrot.slane %v1546, 3
  %1549 = vrot.lane.b32.xlu0 %v1548, 32
  %v1550 = vpop.permute.xlu0 %1549
  %v1552 = vsel %vm74, %v1550, 0
  %1554 = vmatprep.subr.bf16.mxu0 0
  %1555 = vmatpush1.bf16.msra.mxu0 %v951
  %1556 = vmatprep.subr.bf16.mxu0 0
  %1557 = vmatpush1.bf16.msra.mxu0 %v952
  %1558 = vmatprep.subr.bf16.mxu0 0
  %1559 = vmatpush1.bf16.msra.mxu0 0
  %1560 = vmatprep.subr.bf16.mxu0 0
  %1561 = vmatpush1.bf16.msra.mxu0 0
  %1562 = vmatprep.subr.bf16.mxu0 0
  %1563 = vmatpush1.bf16.msra.mxu0 0
  %1564 = vmatprep.subr.bf16.mxu0 0
  %1565 = vmatpush1.bf16.msra.mxu0 0
  %1566 = vmatprep.subr.bf16.mxu0 0
  %1567 = vmatpush1.bf16.msra.mxu0 0
  %1568 = vmatprep.subr.bf16.mxu0 0
  %1569 = vmatpush1.bf16.msra.mxu0 0
  %1570 = vmatprep.subr.bf16.mxu0 0
  %1571 = vmatpush1.bf16.msra.mxu0 0
  %1572 = vmatprep.subr.bf16.mxu0 0
  %1573 = vmatpush1.bf16.msra.mxu0 0
  %1574 = vmatprep.subr.bf16.mxu0 0
  %1575 = vmatpush1.bf16.msra.mxu0 0
  %1576 = vmatprep.subr.bf16.mxu0 0
  %1577 = vmatpush1.bf16.msra.mxu0 0
  %1578 = vmatprep.subr.bf16.mxu0 0
  %1579 = vmatpush1.bf16.msra.mxu0 0
  %1580 = vmatprep.subr.bf16.mxu0 0
  %1581 = vmatpush1.bf16.msra.mxu0 0
  %1582 = vmatprep.subr.bf16.mxu0 0
  %1583 = vmatpush1.bf16.msra.mxu0 0
  %1584 = vmatprep.subr.bf16.mxu0 0
  %1585 = vmatpush1.bf16.msra.mxu0 0
  %1586 = vmatprep.mubr.bf16.mxu0 0
  %1587 = vmatmul.mubr.bf16.gmra.mrb[0].mxu0 %v1552
  %v1588 = vpop.f32.mrb[0].mxu0
  %v1589 = vadd.f32 0.0, %v1588
  %v1590 = vpop.f32.mrb[0].mxu0
  %v1591 = vpop.f32.mrb[0].mxu0
  %v1592 = vpop.f32.mrb[0].mxu0
  %1593 = vdwg.mxu0
  %v1595 = vrot.slane %v1589, 1
  %v1597 = vadd.f32 %v935, %v1595
  %v1598 = vxor.u32 %v1597, 2147483648
  %v1599 = vmul.f32 %v1598, 1.442695
  %v1600 = vpow.pop %v1599
  %v1601 = vadd.f32 %v1600, 1.0
  %v1602 = vrcp.pop %v1601
  %v1603 = vmul.f32 1.0, %v1602
  %v1604 = vtanh.pop %v1597
  %v1606 = vrot.slane %v1533, 7
  %v1608 = vmul.f32 %v1603, %v1606
  %1610 = vrot.lane.b32.xlu0 %v1604, 64
  %v1611 = vpop.permute.xlu0 %1610
  %v1613 = vmul.f32 %v1603, %v1611
  %1615 = vrot.lane.b32.xlu0 %v1613, 32
  %v1616 = vpop.permute.xlu0 %1615
  %v1618 = vadd.f32 %v1608, %v1616
  %v1619 = vtanh.pop %v1618
  %1621 = vrot.lane.b32.xlu0 %v1619, 64
  %v1622 = vpop.permute.xlu0 %1621
  %v1624 = vmul.f32 %v1603, %v1622
  %1626 = vrot.lane.b32.xlu0 %v1624, 32
  %v1627 = vpop.permute.xlu0 %1626
  %vm1629 = vcmask 261127
  %1630 = vst.msk [vmem:[#allocation2] sm:$0x80] %vm1629, %v1627
  %v1631 = vld [vmem:[#allocation2] sm:$0xff]
  %v1632 = vld [vmem:[%s10] sm:$0xff]
  %v1633 = vld [vmem:[%s10 + $0x8] sm:$0xff]
  %v1634 = vld [vmem:[%s10 + $0x10] sm:$0xff]
  %v1635 = vld [vmem:[%s10 + $0x18] sm:$0xff]
  %v1636 = vld [vmem:[%s11] sm:$0x1]
  %v1638 = vlaneseq
  %v1639 = vshrl.u32 %v1638, 7
  %v1640 = vsub.s32 0, %v1639
  %v1641 = vrot.slane %v1636, %v1640
  %v1644 = vsel %vm74, %v1631, 0
  %1646 = vmatprep.subr.mxu0 0.0
  %1647 = vmatpush1.msra.mxu0 %v1632
  %1648 = vmatprep.subr.mxu0 0.0
  %1649 = vmatpush1.msra.mxu0 %v1633
  %1650 = vmatprep.subr.mxu0 0.0
  %1651 = vmatpush1.msra.mxu0 %v1634
  %1652 = vmatprep.subr.mxu0 0.0
  %1653 = vmatpush1.msra.mxu0 %v1635
  %1654 = vmatprep.subr.mxu0 0.0
  %1655 = vmatpush1.msra.mxu0 0.0
  %1656 = vmatprep.subr.mxu0 0.0
  %1657 = vmatpush1.msra.mxu0 0.0
  %1658 = vmatprep.subr.mxu0 0.0
  %1659 = vmatpush1.msra.mxu0 0.0
  %1660 = vmatprep.subr.mxu0 0.0
  %1661 = vmatpush1.msra.mxu0 0.0
  %1662 = vmatprep.subr.mxu0 0.0
  %1663 = vmatpush1.msra.mxu0 0.0
  %1664 = vmatprep.subr.mxu0 0.0
  %1665 = vmatpush1.msra.mxu0 0.0
  %1666 = vmatprep.subr.mxu0 0.0
  %1667 = vmatpush1.msra.mxu0 0.0
  %1668 = vmatprep.subr.mxu0 0.0
  %1669 = vmatpush1.msra.mxu0 0.0
  %1670 = vmatprep.subr.mxu0 0.0
  %1671 = vmatpush1.msra.mxu0 0.0
  %1672 = vmatprep.subr.mxu0 0.0
  %1673 = vmatpush1.msra.mxu0 0.0
  %1674 = vmatprep.subr.mxu0 0.0
  %1675 = vmatpush1.msra.mxu0 0.0
  %1676 = vmatprep.subr.mxu0 0.0
  %1677 = vmatpush1.msra.mxu0 0.0
  %1678 = vmatprep.subr.mxu0 0.0
  %1679 = vmatpush1.msra.mxu0 0.0
  %1680 = vmatprep.subr.mxu0 0.0
  %1681 = vmatpush1.msra.mxu0 0.0
  %1682 = vmatprep.subr.mxu0 0.0
  %1683 = vmatpush1.msra.mxu0 0.0
  %1684 = vmatprep.subr.mxu0 0.0
  %1685 = vmatpush1.msra.mxu0 0.0
  %1686 = vmatprep.subr.mxu0 0.0
  %1687 = vmatpush1.msra.mxu0 0.0
  %1688 = vmatprep.subr.mxu0 0.0
  %1689 = vmatpush1.msra.mxu0 0.0
  %1690 = vmatprep.subr.mxu0 0.0
  %1691 = vmatpush1.msra.mxu0 0.0
  %1692 = vmatprep.subr.mxu0 0.0
  %1693 = vmatpush1.msra.mxu0 0.0
  %1694 = vmatprep.subr.mxu0 0.0
  %1695 = vmatpush1.msra.mxu0 0.0
  %1696 = vmatprep.subr.mxu0 0.0
  %1697 = vmatpush1.msra.mxu0 0.0
  %1698 = vmatprep.subr.mxu0 0.0
  %1699 = vmatpush1.msra.mxu0 0.0
  %1700 = vmatprep.subr.mxu0 0.0
  %1701 = vmatpush1.msra.mxu0 0.0
  %1702 = vmatprep.subr.mxu0 0.0
  %1703 = vmatpush1.msra.mxu0 0.0
  %1704 = vmatprep.subr.mxu0 0.0
  %1705 = vmatpush1.msra.mxu0 0.0
  %1706 = vmatprep.subr.mxu0 0.0
  %1707 = vmatpush1.msra.mxu0 0.0
  %1708 = vmatprep.subr.mxu0 0.0
  %1709 = vmatpush1.msra.mxu0 0.0
  %1710 = vmatprep.mubr.f32.mxu0 0.0
  %1711 = vmatmul.mubr.f32.gmra.mrb[0].mxu0 %v1644
  %v1712 = vpop.f32.mrb[0].mxu0
  %v1713 = vadd.f32 %v1641, %v1712
  %v1714 = vpop.f32.mrb[0].mxu0
  %1715 = vdwg.mxu0
  %1716 = vst [vmem:[%s12] sm:$0xff] %v1713
  // Predicated region
  $region50: #{model_forward.1} parent=0 // pred_check
    _
  $region51: #{model_forward.1} parent=0 // pred_check_branch
    %1718 = sbr.rel (0) target = $region53
  $region52: #{model_forward.1} parent=0 // pred_region
    _
  $region53: #{model_forward.1} parent=0 // pred_fallthru
    _
  // Predicated region
  $region54: #{model_forward.1} parent=0 // pred_check
    _
  $region55: #{model_forward.1} parent=0 // pred_check_branch
    %1720 = sbr.rel (0) target = $region57
  $region56: #{model_forward.1} parent=0 // pred_region
    _
  $region57: #{model_forward.1} parent=0 // pred_fallthru
    _

</llo_original>
